<compile_context>
chip_gen: v7x
topology: tpu7x:2x2x1
jax: 0.10.0
libtpu: 0.0.40
codegen_flags: <defaults>
</compile_context>

<pallas_src>
import functools

import numpy as np
import jax
import jax.numpy as jnp
from jax import lax
from jax.experimental import pallas as pl
from jax.experimental.pallas import tpu as pltpu

THRESHOLD = 4.0
SIGMA = 1.0
IGNORE_INDEX = 255


def _gstmse_kernel(meta_ref, valid_ref, pred_ref, feat_ref, out_ref,
                   pn_ref, fn_ref, have_ref, *, threshold, sigma, num_classes):
    b = pl.program_id(0)

    pred = pred_ref[0].astype(jnp.float32)     # (c_blk, T)
    feat = feat_ref[0].astype(jnp.float32)     # (F, T)
    vrow = valid_ref[0].astype(jnp.float32)    # (1, T)  1.0 = frame not ignored
    T = pred.shape[1]

    n_valid = meta_ref[b, 0]    # number of non-ignored frames
    first_v = meta_ref[b, 1]    # index of first valid frame
    last_v = meta_ref[b, 2]     # index of last valid frame
    n_steps = meta_ref[b, 3]    # doubling fill steps (0 if no interior gaps)

    t_idx = lax.broadcasted_iota(jnp.int32, (1, T), 1)
    valid_b = vrow > 0.5

    def shift_up(x, s):
        # column t <- column t+s (wrap columns masked out by the caller).
        return pltpu.roll(x, shift=T - s, axis=1)

    # --- "next valid frame" fill (gather-free replacement for compaction) ---
    # After the fill, pn/fn column t hold pred/feat of the nearest valid frame
    # strictly after t.  With no interior ignored frames this is just the
    # adjacent-frame roll and all fill steps are skipped at runtime.
    pn_ref[...] = shift_up(pred, 1)
    fn_ref[...] = shift_up(feat, 1)
    have_ref[...] = jnp.where(t_idx < T - 1, shift_up(vrow, 1), 0.0)

    k_max = max(int(T - 1).bit_length(), 1)
    for k in range(k_max):
        s = 1 << k

        @pl.when(k < n_steps)
        def _():
            have = have_ref[...]
            sel = have > 0.5
            pn_ref[...] = jnp.where(sel, pn_ref[...], shift_up(pn_ref[...], s))
            fn_ref[...] = jnp.where(sel, fn_ref[...], shift_up(fn_ref[...], s))
            cand = jnp.where(t_idx < T - s, shift_up(have, s), 0.0)
            have_ref[...] = jnp.maximum(have, cand)

    pred_nxt = pn_ref[...]                                      # (c_blk, T)
    feat_nxt = fn_ref[...]                                      # (F, T)

    # --- Gaussian similarity from valid-pair feature diffs (VPU reduce) -----
    fd = feat_nxt - feat
    ssq = jnp.sum(fd * fd, axis=0, keepdims=True)               # (1, T)
    sim = jnp.exp(-jnp.sqrt(ssq) / (2.0 * sigma ** 2))          # (1, T)

    # --- two independent masked time log-sum-exps (numerically faithful) ----
    # ls1 uses valid frames without the first one, ls0 without the last one;
    # both are order-independent, so no compaction is required.
    neg_big = jnp.float32(-1e30)
    x0 = jnp.where(jnp.logical_and(valid_b, t_idx != last_v), pred, neg_big)
    x1 = jnp.where(jnp.logical_and(valid_b, t_idx != first_v), pred, neg_big)
    m0 = jnp.max(x0, axis=1, keepdims=True)
    m1 = jnp.max(x1, axis=1, keepdims=True)
    lse0 = m0 + jnp.log(jnp.sum(jnp.exp(x0 - m0), axis=1, keepdims=True))
    lse1 = m1 + jnp.log(jnp.sum(jnp.exp(x1 - m1), axis=1, keepdims=True))
    dlse = lse1 - lse0                                          # (c_blk, 1)

    d = (pred_nxt - pred) - dlse                                # (c_blk, T)
    mse = jnp.minimum(d * d, jnp.float32(threshold * threshold))
    pair_m = jnp.logical_and(valid_b, t_idx < last_v)           # (1, T)
    loss = jnp.where(pair_m, sim * mse, 0.0)                    # (c_blk, T)

    # All-ignored / single-valid samples contribute 0 (reference would NaN).
    n_pairs = jnp.maximum(n_valid - 1, 1).astype(jnp.float32)
    partial = jnp.sum(loss) / (n_pairs * float(num_classes))
    out_ref[...] = jnp.broadcast_to(partial, out_ref.shape).astype(out_ref.dtype)


def gaussian_similarity_tmse(preds, gts, feats, *, threshold=THRESHOLD,
                             sigma=SIGMA, ignore_index=IGNORE_INDEX):
    B, C, T = preds.shape
    Fd = feats.shape[1]

    # --- tiny host-side metadata (O(B*T) on int/bool arrays only; the big
    #     preds/feats tensors are read exactly once, by the kernel) ----------
    valid = gts != ignore_index                               # (B, T) bool
    ar = jnp.arange(T, dtype=jnp.int32)[None, :]
    counts = jnp.sum(valid, axis=1).astype(jnp.int32)
    first_v = jnp.min(jnp.where(valid, ar, T), axis=1).astype(jnp.int32)
    last_v = jnp.max(jnp.where(valid, ar, -1), axis=1).astype(jnp.int32)

    # longest run of ignored frames a valid->valid pair must bridge
    idx_or_T = jnp.where(valid, ar, T)
    nxt = lax.cummin(idx_or_T, axis=1, reverse=True)          # next valid >= t
    nxt_after = jnp.concatenate(
        [nxt[:, 1:], jnp.full((B, 1), T, dtype=jnp.int32)], axis=1)
    used = jnp.logical_and(valid, ar < last_v[:, None])
    gap = jnp.where(used, nxt_after - (ar + 1), 0)
    max_gap = jnp.max(gap, axis=1)
    fill_steps = jnp.where(
        max_gap > 0,
        jnp.ceil(jnp.log2(max_gap.astype(jnp.float32) + 1.0)),
        0.0).astype(jnp.int32)

    meta = jnp.stack([counts, first_v, last_v, fill_steps], axis=1)  # (B, 4)
    valid_f = valid.astype(jnp.float32).reshape(B, 1, T)

    # --- class-block grid axis: engages the 2nd TensorCore (v7x) when B is
    #     small; feats' block index is c-invariant so they load once per b.
    if B < 4 and C >= 16 and C % 8 == 0 and (C // 2) % 8 == 0:
        c_blk = C // 2
    else:
        c_blk = C
    nc = C // c_blk

    # --- VMEM budget from the block footprint, capped below physical VMEM ---
    isz = preds.dtype.itemsize
    est = (2 * T * (c_blk * isz + Fd * isz + 4)       # double-buffered inputs
           + (c_blk + Fd + 1) * T * 4                 # fill scratch
           + 8 * (c_blk + Fd) * T * 4                 # f32 temporaries
           + (4 << 20))
    try:
        cap = int(pltpu.get_tpu_info().vmem_capacity_bytes)
    except Exception:
        cap = 128 << 20
    vmem_limit = int(min((cap * 3) // 4, max(32 << 20, est)))
    # TODO(synk): for production F*T that overflow this budget (v7x, 64 MiB
    # physical) add an inner T-tile pipeline with an online LSE + 1-col halo.
    # TODO(synk): when B is large and (C+F)*T is tiny, pack several batch
    # samples per grid step (and consider pl.Buffered(3) on v6e) to amortize
    # the ~0.35us per-step overhead.

    cost = pl.CostEstimate(
        flops=int(B * T * (10 * C + 6 * Fd)),
        transcendentals=int(B * T * (2 * C + 1)),
        bytes_accessed=int(B * T * (C * isz + Fd * isz + 4) + B * nc * 512),
    )

    kernel = functools.partial(_gstmse_kernel, threshold=float(threshold),
                               sigma=float(sigma), num_classes=C)
    out = pl.pallas_call(
        kernel,
        out_shape=jax.ShapeDtypeStruct((B, nc, 1, 128), jnp.float32),
        grid_spec=pltpu.PrefetchScalarGridSpec(
            num_scalar_prefetch=1,
            grid=(B, nc),
            in_specs=[
                pl.BlockSpec((1, 1, T), lambda b, c, sref: (b, 0, 0)),
                pl.BlockSpec((1, c_blk, T), lambda b, c, sref: (b, c, 0)),
                pl.BlockSpec((1, Fd, T), lambda b, c, sref: (b, 0, 0)),
            ],
            out_specs=pl.BlockSpec((1, 1, 1, 128),
                                   lambda b, c, sref: (b, c, 0, 0)),
            scratch_shapes=[
                pltpu.VMEM((c_blk, T), jnp.float32),
                pltpu.VMEM((Fd, T), jnp.float32),
                pltpu.VMEM((1, T), jnp.float32),
            ],
        ),
        compiler_params=pltpu.CompilerParams(
            dimension_semantics=("parallel", "parallel"),
            vmem_limit_bytes=vmem_limit),
        cost_estimate=cost,
    )(meta, valid_f, preds, feats)    # preds/feats stay in caller dtype

    # per-(b, c-block) partial sums -> per-sample mean -> batch mean
    return jnp.mean(jnp.sum(out[:, :, 0, 0], axis=1))


def _reference(preds, gts, feats, threshold=THRESHOLD, sigma=SIGMA,
               ignore_index=IGNORE_INDEX):
    preds = np.asarray(preds); gts = np.asarray(gts); feats = np.asarray(feats)

    def log_softmax(x, axis):
        m = x.max(axis=axis, keepdims=True)
        return x - (np.log(np.exp(x - m).sum(axis=axis, keepdims=True)) + m)

    total = 0.0
    B = preds.shape[0]
    for b in range(B):
        idx = np.where(gts[b] != ignore_index)[0]
        pred = preds[b][:, idx]
        feat = feats[b][:, idx]
        diff = feat[:, 1:] - feat[:, :-1]
        sim = np.exp(-np.linalg.norm(diff, axis=0) / (2.0 * sigma ** 2))
        ls1 = log_softmax(pred[:, 1:], axis=1)
        ls0 = log_softmax(pred[:, :-1], axis=1)
        loss = np.clip((ls1 - ls0) ** 2, 0.0, threshold ** 2)
        total += (sim * loss).mean()
    return total / B


if __name__ == "__main__":
    key = jax.random.PRNGKey(0)
    k1, k2, k3 = jax.random.split(key, 3)

    B, C, T, Fd = 2, 16, 128, 16  # batch, num_classes, seq_len, feat_dim
    preds = jax.random.normal(k1, (B, C, T), dtype=jnp.float32)
    feats = jax.random.normal(k2, (B, Fd, T), dtype=jnp.float32)
    gts = jax.random.randint(k3, (B, T), 0, C).astype(jnp.int32)
    # sprinkle ignore_index frames: isolated, a 2-frame interior run, and
    # boundary frames (exercises the fill path and the first/last-valid logic)
    gts = gts.at[0, 3].set(IGNORE_INDEX).at[0, 50].set(IGNORE_INDEX)
    gts = gts.at[0, 51].set(IGNORE_INDEX).at[0, 100].set(IGNORE_INDEX)
    gts = gts.at[1, 0].set(IGNORE_INDEX).at[1, 77].set(IGNORE_INDEX)
    gts = gts.at[1, 127].set(IGNORE_INDEX)

    out = gaussian_similarity_tmse(preds, gts, feats)
    out = jax.block_until_ready(out)

    ref = _reference(preds, gts, feats)
    np.testing.assert_allclose(np.asarray(out), ref, rtol=1e-4, atol=1e-5)

    print("KERNEL_OK")
</pallas_src>

<mosaic_0001>
module attributes {stable_mosaic.version = 11 : i64} {
  func.func @_gstmse_kernel(%arg0: i32, %arg1: i32, %arg2: memref<2x4xi32, #tpu.memory_space<smem>>, %arg3: memref<1x1x128xf32, #tpu.memory_space<vmem>>, %arg4: memref<1x8x128xf32, #tpu.memory_space<vmem>>, %arg5: memref<1x16x128xf32, #tpu.memory_space<vmem>>, %arg6: memref<1x1x1x128xf32, #tpu.memory_space<vmem>>, %arg7: memref<8x128xf32, #tpu.memory_space<vmem>>, %arg8: memref<16x128xf32, #tpu.memory_space<vmem>>, %arg9: memref<1x128xf32, #tpu.memory_space<vmem>>) attributes {dimension_semantics = [#tpu.dimension_semantics<parallel>, #tpu.dimension_semantics<parallel>], iteration_bounds = array<i64: 2, 2>, scalar_prefetch = 1 : i64, scratch_operands = 3 : i64, tpu.core_type = #tpu.core_type<tc>, window_params = [{transform_indices = @transform_0, window_bounds = array<i64: 1, 1, 128>}, {transform_indices = @transform_1, window_bounds = array<i64: 1, 8, 128>}, {transform_indices = @transform_2, window_bounds = array<i64: 1, 16, 128>}, {transform_indices = @transform_3, window_bounds = array<i64: 1, 1, 1, 128>}]} {
    %c0 = arith.constant 0 : index
    %c0_0 = arith.constant 0 : index
    %c0_1 = arith.constant 0 : index
    %0 = vector.load %arg4[%c0, %c0_0, %c0_1] : memref<1x8x128xf32, #tpu.memory_space<vmem>>, vector<1x8x128xf32>
    %1 = vector.shape_cast %0 : vector<1x8x128xf32> to vector<8x128xf32>
    %c0_2 = arith.constant 0 : index
    %c0_3 = arith.constant 0 : index
    %c0_4 = arith.constant 0 : index
    %2 = vector.load %arg5[%c0_2, %c0_3, %c0_4] : memref<1x16x128xf32, #tpu.memory_space<vmem>>, vector<1x16x128xf32>
    %3 = vector.shape_cast %2 : vector<1x16x128xf32> to vector<16x128xf32>
    %c0_5 = arith.constant 0 : index
    %c0_6 = arith.constant 0 : index
    %c0_7 = arith.constant 0 : index
    %4 = vector.load %arg3[%c0_5, %c0_6, %c0_7] : memref<1x1x128xf32, #tpu.memory_space<vmem>>, vector<1x1x128xf32>
    %5 = vector.shape_cast %4 : vector<1x1x128xf32> to vector<1x128xf32>
    %6 = arith.index_cast %arg0 : i32 to index
    %c0_8 = arith.constant 0 : index
    %7 = memref.load %arg2[%6, %c0_8] : memref<2x4xi32, #tpu.memory_space<smem>>
    %8 = arith.index_cast %arg0 : i32 to index
    %c1 = arith.constant 1 : index
    %9 = memref.load %arg2[%8, %c1] : memref<2x4xi32, #tpu.memory_space<smem>>
    %10 = arith.index_cast %arg0 : i32 to index
    %c2 = arith.constant 2 : index
    %11 = memref.load %arg2[%10, %c2] : memref<2x4xi32, #tpu.memory_space<smem>>
    %12 = arith.index_cast %arg0 : i32 to index
    %c3 = arith.constant 3 : index
    %13 = memref.load %arg2[%12, %c3] : memref<2x4xi32, #tpu.memory_space<smem>>
    %14 = tpu.iota {dimensions = array<i32: 1>} : vector<1x128xi32>
    %cst = arith.constant 5.000000e-01 : f32
    %15 = vector.broadcast %cst : f32 to vector<1x128xf32>
    %16 = arith.cmpf ogt, %5, %15 : vector<1x128xf32>
    %c127_i32 = arith.constant 127 : i32
    %17 = tpu.dynamic_rotate %1 by %c127_i32 dim 1 : vector<8x128xf32>, i32 -> vector<8x128xf32>
    %c0_9 = arith.constant 0 : index
    %c0_10 = arith.constant 0 : index
    %18 = vector.load %arg7[%c0_9, %c0_10] : memref<8x128xf32, #tpu.memory_space<vmem>>, vector<8x128xf32>
    tpu.vector_store %arg7[%c0_9, %c0_10], %17 {strides = array<i32>} : memref<8x128xf32, #tpu.memory_space<vmem>>, vector<8x128xf32>,
    %c127_i32_11 = arith.constant 127 : i32
    %19 = tpu.dynamic_rotate %3 by %c127_i32_11 dim 1 : vector<16x128xf32>, i32 -> vector<16x128xf32>
    %c0_12 = arith.constant 0 : index
    %c0_13 = arith.constant 0 : index
    %20 = vector.load %arg8[%c0_12, %c0_13] : memref<16x128xf32, #tpu.memory_space<vmem>>, vector<16x128xf32>
    tpu.vector_store %arg8[%c0_12, %c0_13], %19 {strides = array<i32>} : memref<16x128xf32, #tpu.memory_space<vmem>>, vector<16x128xf32>,
    %c127_i32_14 = arith.constant 127 : i32
    %21 = vector.broadcast %c127_i32_14 : i32 to vector<1x128xi32>
    %22 = arith.cmpi slt, %14, %21 : vector<1x128xi32>
    %c127_i32_15 = arith.constant 127 : i32
    %23 = tpu.dynamic_rotate %5 by %c127_i32_15 dim 1 : vector<1x128xf32>, i32 -> vector<1x128xf32>
    %cst_16 = arith.constant 0.000000e+00 : f32
    %24 = vector.broadcast %cst_16 : f32 to vector<1x128xf32>
    %25 = arith.select %22, %23, %24 : vector<1x128xi1>, vector<1x128xf32>
    %c0_17 = arith.constant 0 : index
    %c0_18 = arith.constant 0 : index
    %26 = vector.load %arg9[%c0_17, %c0_18] : memref<1x128xf32, #tpu.memory_space<vmem>>, vector<1x128xf32>
    tpu.vector_store %arg9[%c0_17, %c0_18], %25 {strides = array<i32>} : memref<1x128xf32, #tpu.memory_space<vmem>>, vector<1x128xf32>,
    %c0_i32 = arith.constant 0 : i32
    %27 = arith.cmpi sgt, %13, %c0_i32 : i32
    %28 = arith.extui %27 : i1 to i32
    %c0_i32_19 = arith.constant 0 : i32
    %29 = arith.cmpi ne, %28, %c0_i32_19 : i32
    scf.if %29 {
      %c0_49 = arith.constant 0 : index
      %c0_50 = arith.constant 0 : index
      %119 = vector.load %arg9[%c0_49, %c0_50] : memref<1x128xf32, #tpu.memory_space<vmem>>, vector<1x128xf32>
      %cst_51 = arith.constant 5.000000e-01 : f32
      %120 = vector.broadcast %cst_51 : f32 to vector<1x128xf32>
      %121 = arith.cmpf ogt, %119, %120 : vector<1x128xf32>
      %c0_52 = arith.constant 0 : index
      %c0_53 = arith.constant 0 : index
      %122 = vector.load %arg7[%c0_52, %c0_53] : memref<8x128xf32, #tpu.memory_space<vmem>>, vector<8x128xf32>
      %c0_54 = arith.constant 0 : index
      %c0_55 = arith.constant 0 : index
      %123 = vector.load %arg7[%c0_54, %c0_55] : memref<8x128xf32, #tpu.memory_space<vmem>>, vector<8x128xf32>
      %c127_i32_56 = arith.constant 127 : i32
      %124 = tpu.dynamic_rotate %123 by %c127_i32_56 dim 1 : vector<8x128xf32>, i32 -> vector<8x128xf32>
      %125 = vector.shape_cast %121 : vector<1x128xi1> to vector<1x128xi1>
      %126 = vector.broadcast %125 : vector<1x128xi1> to vector<8x128xi1>
      %127 = arith.select %126, %122, %124 : vector<8x128xi1>, vector<8x128xf32>
      %c0_57 = arith.constant 0 : index
      %c0_58 = arith.constant 0 : index
      %128 = vector.load %arg7[%c0_57, %c0_58] : memref<8x128xf32, #tpu.memory_space<vmem>>, vector<8x128xf32>
      tpu.vector_store %arg7[%c0_57, %c0_58], %127 {strides = array<i32>} : memref<8x128xf32, #tpu.memory_space<vmem>>, vector<8x128xf32>,
      %c0_59 = arith.constant 0 : index
      %c0_60 = arith.constant 0 : index
      %129 = vector.load %arg8[%c0_59, %c0_60] : memref<16x128xf32, #tpu.memory_space<vmem>>, vector<16x128xf32>
      %c0_61 = arith.constant 0 : index
      %c0_62 = arith.constant 0 : index
      %130 = vector.load %arg8[%c0_61, %c0_62] : memref<16x128xf32, #tpu.memory_space<vmem>>, vector<16x128xf32>
      %c127_i32_63 = arith.constant 127 : i32
      %131 = tpu.dynamic_rotate %130 by %c127_i32_63 dim 1 : vector<16x128xf32>, i32 -> vector<16x128xf32>
      %132 = vector.shape_cast %121 : vector<1x128xi1> to vector<1x128xi1>
      %133 = vector.broadcast %132 : vector<1x128xi1> to vector<16x128xi1>
      %134 = arith.select %133, %129, %131 : vector<16x128xi1>, vector<16x128xf32>
      %c0_64 = arith.constant 0 : index
      %c0_65 = arith.constant 0 : index
      %135 = vector.load %arg8[%c0_64, %c0_65] : memref<16x128xf32, #tpu.memory_space<vmem>>, vector<16x128xf32>
      tpu.vector_store %arg8[%c0_64, %c0_65], %134 {strides = array<i32>} : memref<16x128xf32, #tpu.memory_space<vmem>>, vector<16x128xf32>,
      %c127_i32_66 = arith.constant 127 : i32
      %136 = vector.broadcast %c127_i32_66 : i32 to vector<1x128xi32>
      %137 = arith.cmpi slt, %14, %136 : vector<1x128xi32>
      %c127_i32_67 = arith.constant 127 : i32
      %138 = tpu.dynamic_rotate %119 by %c127_i32_67 dim 1 : vector<1x128xf32>, i32 -> vector<1x128xf32>
      %cst_68 = arith.constant 0.000000e+00 : f32
      %139 = vector.broadcast %cst_68 : f32 to vector<1x128xf32>
      %140 = arith.select %137, %138, %139 : vector<1x128xi1>, vector<1x128xf32>
      %141 = arith.maximumf %119, %140 : vector<1x128xf32>
      %c0_69 = arith.constant 0 : index
      %c0_70 = arith.constant 0 : index
      %142 = vector.load %arg9[%c0_69, %c0_70] : memref<1x128xf32, #tpu.memory_space<vmem>>, vector<1x128xf32>
      tpu.vector_store %arg9[%c0_69, %c0_70], %141 {strides = array<i32>} : memref<1x128xf32, #tpu.memory_space<vmem>>, vector<1x128xf32>,
    } else {
    }
    %c1_i32 = arith.constant 1 : i32
    %30 = arith.cmpi sgt, %13, %c1_i32 : i32
    %31 = arith.extui %30 : i1 to i32
    %c0_i32_20 = arith.constant 0 : i32
    %32 = arith.cmpi ne, %31, %c0_i32_20 : i32
    scf.if %32 {
      %c0_49 = arith.constant 0 : index
      %c0_50 = arith.constant 0 : index
      %119 = vector.load %arg9[%c0_49, %c0_50] : memref<1x128xf32, #tpu.memory_space<vmem>>, vector<1x128xf32>
      %cst_51 = arith.constant 5.000000e-01 : f32
      %120 = vector.broadcast %cst_51 : f32 to vector<1x128xf32>
      %121 = arith.cmpf ogt, %119, %120 : vector<1x128xf32>
      %c0_52 = arith.constant 0 : index
      %c0_53 = arith.constant 0 : index
      %122 = vector.load %arg7[%c0_52, %c0_53] : memref<8x128xf32, #tpu.memory_space<vmem>>, vector<8x128xf32>
      %c0_54 = arith.constant 0 : index
      %c0_55 = arith.constant 0 : index
      %123 = vector.load %arg7[%c0_54, %c0_55] : memref<8x128xf32, #tpu.memory_space<vmem>>, vector<8x128xf32>
      %c126_i32 = arith.constant 126 : i32
      %124 = tpu.dynamic_rotate %123 by %c126_i32 dim 1 : vector<8x128xf32>, i32 -> vector<8x128xf32>
      %125 = vector.shape_cast %121 : vector<1x128xi1> to vector<1x128xi1>
      %126 = vector.broadcast %125 : vector<1x128xi1> to vector<8x128xi1>
      %127 = arith.select %126, %122, %124 : vector<8x128xi1>, vector<8x128xf32>
      %c0_56 = arith.constant 0 : index
      %c0_57 = arith.constant 0 : index
      %128 = vector.load %arg7[%c0_56, %c0_57] : memref<8x128xf32, #tpu.memory_space<vmem>>, vector<8x128xf32>
      tpu.vector_store %arg7[%c0_56, %c0_57], %127 {strides = array<i32>} : memref<8x128xf32, #tpu.memory_space<vmem>>, vector<8x128xf32>,
      %c0_58 = arith.constant 0 : index
      %c0_59 = arith.constant 0 : index
      %129 = vector.load %arg8[%c0_58, %c0_59] : memref<16x128xf32, #tpu.memory_space<vmem>>, vector<16x128xf32>
      %c0_60 = arith.constant 0 : index
      %c0_61 = arith.constant 0 : index
      %130 = vector.load %arg8[%c0_60, %c0_61] : memref<16x128xf32, #tpu.memory_space<vmem>>, vector<16x128xf32>
      %c126_i32_62 = arith.constant 126 : i32
      %131 = tpu.dynamic_rotate %130 by %c126_i32_62 dim 1 : vector<16x128xf32>, i32 -> vector<16x128xf32>
      %132 = vector.shape_cast %121 : vector<1x128xi1> to vector<1x128xi1>
      %133 = vector.broadcast %132 : vector<1x128xi1> to vector<16x128xi1>
      %134 = arith.select %133, %129, %131 : vector<16x128xi1>, vector<16x128xf32>
      %c0_63 = arith.constant 0 : index
      %c0_64 = arith.constant 0 : index
      %135 = vector.load %arg8[%c0_63, %c0_64] : memref<16x128xf32, #tpu.memory_space<vmem>>, vector<16x128xf32>
      tpu.vector_store %arg8[%c0_63, %c0_64], %134 {strides = array<i32>} : memref<16x128xf32, #tpu.memory_space<vmem>>, vector<16x128xf32>,
      %c126_i32_65 = arith.constant 126 : i32
      %136 = vector.broadcast %c126_i32_65 : i32 to vector<1x128xi32>
      %137 = arith.cmpi slt, %14, %136 : vector<1x128xi32>
      %c126_i32_66 = arith.constant 126 : i32
      %138 = tpu.dynamic_rotate %119 by %c126_i32_66 dim 1 : vector<1x128xf32>, i32 -> vector<1x128xf32>
      %cst_67 = arith.constant 0.000000e+00 : f32
      %139 = vector.broadcast %cst_67 : f32 to vector<1x128xf32>
      %140 = arith.select %137, %138, %139 : vector<1x128xi1>, vector<1x128xf32>
      %141 = arith.maximumf %119, %140 : vector<1x128xf32>
      %c0_68 = arith.constant 0 : index
      %c0_69 = arith.constant 0 : index
      %142 = vector.load %arg9[%c0_68, %c0_69] : memref<1x128xf32, #tpu.memory_space<vmem>>, vector<1x128xf32>
      tpu.vector_store %arg9[%c0_68, %c0_69], %141 {strides = array<i32>} : memref<1x128xf32, #tpu.memory_space<vmem>>, vector<1x128xf32>,
    } else {
    }
    %c2_i32 = arith.constant 2 : i32
    %33 = arith.cmpi sgt, %13, %c2_i32 : i32
    %34 = arith.extui %33 : i1 to i32
    %c0_i32_21 = arith.constant 0 : i32
    %35 = arith.cmpi ne, %34, %c0_i32_21 : i32
    scf.if %35 {
      %c0_49 = arith.constant 0 : index
      %c0_50 = arith.constant 0 : index
      %119 = vector.load %arg9[%c0_49, %c0_50] : memref<1x128xf32, #tpu.memory_space<vmem>>, vector<1x128xf32>
      %cst_51 = arith.constant 5.000000e-01 : f32
      %120 = vector.broadcast %cst_51 : f32 to vector<1x128xf32>
      %121 = arith.cmpf ogt, %119, %120 : vector<1x128xf32>
      %c0_52 = arith.constant 0 : index
      %c0_53 = arith.constant 0 : index
      %122 = vector.load %arg7[%c0_52, %c0_53] : memref<8x128xf32, #tpu.memory_space<vmem>>, vector<8x128xf32>
      %c0_54 = arith.constant 0 : index
      %c0_55 = arith.constant 0 : index
      %123 = vector.load %arg7[%c0_54, %c0_55] : memref<8x128xf32, #tpu.memory_space<vmem>>, vector<8x128xf32>
      %c124_i32 = arith.constant 124 : i32
      %124 = tpu.dynamic_rotate %123 by %c124_i32 dim 1 : vector<8x128xf32>, i32 -> vector<8x128xf32>
      %125 = vector.shape_cast %121 : vector<1x128xi1> to vector<1x128xi1>
      %126 = vector.broadcast %125 : vector<1x128xi1> to vector<8x128xi1>
      %127 = arith.select %126, %122, %124 : vector<8x128xi1>, vector<8x128xf32>
      %c0_56 = arith.constant 0 : index
      %c0_57 = arith.constant 0 : index
      %128 = vector.load %arg7[%c0_56, %c0_57] : memref<8x128xf32, #tpu.memory_space<vmem>>, vector<8x128xf32>
      tpu.vector_store %arg7[%c0_56, %c0_57], %127 {strides = array<i32>} : memref<8x128xf32, #tpu.memory_space<vmem>>, vector<8x128xf32>,
      %c0_58 = arith.constant 0 : index
      %c0_59 = arith.constant 0 : index
      %129 = vector.load %arg8[%c0_58, %c0_59] : memref<16x128xf32, #tpu.memory_space<vmem>>, vector<16x128xf32>
      %c0_60 = arith.constant 0 : index
      %c0_61 = arith.constant 0 : index
      %130 = vector.load %arg8[%c0_60, %c0_61] : memref<16x128xf32, #tpu.memory_space<vmem>>, vector<16x128xf32>
      %c124_i32_62 = arith.constant 124 : i32
      %131 = tpu.dynamic_rotate %130 by %c124_i32_62 dim 1 : vector<16x128xf32>, i32 -> vector<16x128xf32>
      %132 = vector.shape_cast %121 : vector<1x128xi1> to vector<1x128xi1>
      %133 = vector.broadcast %132 : vector<1x128xi1> to vector<16x128xi1>
      %134 = arith.select %133, %129, %131 : vector<16x128xi1>, vector<16x128xf32>
      %c0_63 = arith.constant 0 : index
      %c0_64 = arith.constant 0 : index
      %135 = vector.load %arg8[%c0_63, %c0_64] : memref<16x128xf32, #tpu.memory_space<vmem>>, vector<16x128xf32>
      tpu.vector_store %arg8[%c0_63, %c0_64], %134 {strides = array<i32>} : memref<16x128xf32, #tpu.memory_space<vmem>>, vector<16x128xf32>,
      %c124_i32_65 = arith.constant 124 : i32
      %136 = vector.broadcast %c124_i32_65 : i32 to vector<1x128xi32>
      %137 = arith.cmpi slt, %14, %136 : vector<1x128xi32>
      %c124_i32_66 = arith.constant 124 : i32
      %138 = tpu.dynamic_rotate %119 by %c124_i32_66 dim 1 : vector<1x128xf32>, i32 -> vector<1x128xf32>
      %cst_67 = arith.constant 0.000000e+00 : f32
      %139 = vector.broadcast %cst_67 : f32 to vector<1x128xf32>
      %140 = arith.select %137, %138, %139 : vector<1x128xi1>, vector<1x128xf32>
      %141 = arith.maximumf %119, %140 : vector<1x128xf32>
      %c0_68 = arith.constant 0 : index
      %c0_69 = arith.constant 0 : index
      %142 = vector.load %arg9[%c0_68, %c0_69] : memref<1x128xf32, #tpu.memory_space<vmem>>, vector<1x128xf32>
      tpu.vector_store %arg9[%c0_68, %c0_69], %141 {strides = array<i32>} : memref<1x128xf32, #tpu.memory_space<vmem>>, vector<1x128xf32>,
    } else {
    }
    %c3_i32 = arith.constant 3 : i32
    %36 = arith.cmpi sgt, %13, %c3_i32 : i32
    %37 = arith.extui %36 : i1 to i32
    %c0_i32_22 = arith.constant 0 : i32
    %38 = arith.cmpi ne, %37, %c0_i32_22 : i32
    scf.if %38 {
      %c0_49 = arith.constant 0 : index
      %c0_50 = arith.constant 0 : index
      %119 = vector.load %arg9[%c0_49, %c0_50] : memref<1x128xf32, #tpu.memory_space<vmem>>, vector<1x128xf32>
      %cst_51 = arith.constant 5.000000e-01 : f32
      %120 = vector.broadcast %cst_51 : f32 to vector<1x128xf32>
      %121 = arith.cmpf ogt, %119, %120 : vector<1x128xf32>
      %c0_52 = arith.constant 0 : index
      %c0_53 = arith.constant 0 : index
      %122 = vector.load %arg7[%c0_52, %c0_53] : memref<8x128xf32, #tpu.memory_space<vmem>>, vector<8x128xf32>
      %c0_54 = arith.constant 0 : index
      %c0_55 = arith.constant 0 : index
      %123 = vector.load %arg7[%c0_54, %c0_55] : memref<8x128xf32, #tpu.memory_space<vmem>>, vector<8x128xf32>
      %c120_i32 = arith.constant 120 : i32
      %124 = tpu.dynamic_rotate %123 by %c120_i32 dim 1 : vector<8x128xf32>, i32 -> vector<8x128xf32>
      %125 = vector.shape_cast %121 : vector<1x128xi1> to vector<1x128xi1>
      %126 = vector.broadcast %125 : vector<1x128xi1> to vector<8x128xi1>
      %127 = arith.select %126, %122, %124 : vector<8x128xi1>, vector<8x128xf32>
      %c0_56 = arith.constant 0 : index
      %c0_57 = arith.constant 0 : index
      %128 = vector.load %arg7[%c0_56, %c0_57] : memref<8x128xf32, #tpu.memory_space<vmem>>, vector<8x128xf32>
      tpu.vector_store %arg7[%c0_56, %c0_57], %127 {strides = array<i32>} : memref<8x128xf32, #tpu.memory_space<vmem>>, vector<8x128xf32>,
      %c0_58 = arith.constant 0 : index
      %c0_59 = arith.constant 0 : index
      %129 = vector.load %arg8[%c0_58, %c0_59] : memref<16x128xf32, #tpu.memory_space<vmem>>, vector<16x128xf32>
      %c0_60 = arith.constant 0 : index
      %c0_61 = arith.constant 0 : index
      %130 = vector.load %arg8[%c0_60, %c0_61] : memref<16x128xf32, #tpu.memory_space<vmem>>, vector<16x128xf32>
      %c120_i32_62 = arith.constant 120 : i32
      %131 = tpu.dynamic_rotate %130 by %c120_i32_62 dim 1 : vector<16x128xf32>, i32 -> vector<16x128xf32>
      %132 = vector.shape_cast %121 : vector<1x128xi1> to vector<1x128xi1>
      %133 = vector.broadcast %132 : vector<1x128xi1> to vector<16x128xi1>
      %134 = arith.select %133, %129, %131 : vector<16x128xi1>, vector<16x128xf32>
      %c0_63 = arith.constant 0 : index
      %c0_64 = arith.constant 0 : index
      %135 = vector.load %arg8[%c0_63, %c0_64] : memref<16x128xf32, #tpu.memory_space<vmem>>, vector<16x128xf32>
      tpu.vector_store %arg8[%c0_63, %c0_64], %134 {strides = array<i32>} : memref<16x128xf32, #tpu.memory_space<vmem>>, vector<16x128xf32>,
      %c120_i32_65 = arith.constant 120 : i32
      %136 = vector.broadcast %c120_i32_65 : i32 to vector<1x128xi32>
      %137 = arith.cmpi slt, %14, %136 : vector<1x128xi32>
      %c120_i32_66 = arith.constant 120 : i32
      %138 = tpu.dynamic_rotate %119 by %c120_i32_66 dim 1 : vector<1x128xf32>, i32 -> vector<1x128xf32>
      %cst_67 = arith.constant 0.000000e+00 : f32
      %139 = vector.broadcast %cst_67 : f32 to vector<1x128xf32>
      %140 = arith.select %137, %138, %139 : vector<1x128xi1>, vector<1x128xf32>
      %141 = arith.maximumf %119, %140 : vector<1x128xf32>
      %c0_68 = arith.constant 0 : index
      %c0_69 = arith.constant 0 : index
      %142 = vector.load %arg9[%c0_68, %c0_69] : memref<1x128xf32, #tpu.memory_space<vmem>>, vector<1x128xf32>
      tpu.vector_store %arg9[%c0_68, %c0_69], %141 {strides = array<i32>} : memref<1x128xf32, #tpu.memory_space<vmem>>, vector<1x128xf32>,
    } else {
    }
    %c4_i32 = arith.constant 4 : i32
    %39 = arith.cmpi sgt, %13, %c4_i32 : i32
    %40 = arith.extui %39 : i1 to i32
    %c0_i32_23 = arith.constant 0 : i32
    %41 = arith.cmpi ne, %40, %c0_i32_23 : i32
    scf.if %41 {
      %c0_49 = arith.constant 0 : index
      %c0_50 = arith.constant 0 : index
      %119 = vector.load %arg9[%c0_49, %c0_50] : memref<1x128xf32, #tpu.memory_space<vmem>>, vector<1x128xf32>
      %cst_51 = arith.constant 5.000000e-01 : f32
      %120 = vector.broadcast %cst_51 : f32 to vector<1x128xf32>
      %121 = arith.cmpf ogt, %119, %120 : vector<1x128xf32>
      %c0_52 = arith.constant 0 : index
      %c0_53 = arith.constant 0 : index
      %122 = vector.load %arg7[%c0_52, %c0_53] : memref<8x128xf32, #tpu.memory_space<vmem>>, vector<8x128xf32>
      %c0_54 = arith.constant 0 : index
      %c0_55 = arith.constant 0 : index
      %123 = vector.load %arg7[%c0_54, %c0_55] : memref<8x128xf32, #tpu.memory_space<vmem>>, vector<8x128xf32>
      %c112_i32 = arith.constant 112 : i32
      %124 = tpu.dynamic_rotate %123 by %c112_i32 dim 1 : vector<8x128xf32>, i32 -> vector<8x128xf32>
      %125 = vector.shape_cast %121 : vector<1x128xi1> to vector<1x128xi1>
      %126 = vector.broadcast %125 : vector<1x128xi1> to vector<8x128xi1>
      %127 = arith.select %126, %122, %124 : vector<8x128xi1>, vector<8x128xf32>
      %c0_56 = arith.constant 0 : index
      %c0_57 = arith.constant 0 : index
      %128 = vector.load %arg7[%c0_56, %c0_57] : memref<8x128xf32, #tpu.memory_space<vmem>>, vector<8x128xf32>
      tpu.vector_store %arg7[%c0_56, %c0_57], %127 {strides = array<i32>} : memref<8x128xf32, #tpu.memory_space<vmem>>, vector<8x128xf32>,
      %c0_58 = arith.constant 0 : index
      %c0_59 = arith.constant 0 : index
      %129 = vector.load %arg8[%c0_58, %c0_59] : memref<16x128xf32, #tpu.memory_space<vmem>>, vector<16x128xf32>
      %c0_60 = arith.constant 0 : index
      %c0_61 = arith.constant 0 : index
      %130 = vector.load %arg8[%c0_60, %c0_61] : memref<16x128xf32, #tpu.memory_space<vmem>>, vector<16x128xf32>
      %c112_i32_62 = arith.constant 112 : i32
      %131 = tpu.dynamic_rotate %130 by %c112_i32_62 dim 1 : vector<16x128xf32>, i32 -> vector<16x128xf32>
      %132 = vector.shape_cast %121 : vector<1x128xi1> to vector<1x128xi1>
      %133 = vector.broadcast %132 : vector<1x128xi1> to vector<16x128xi1>
      %134 = arith.select %133, %129, %131 : vector<16x128xi1>, vector<16x128xf32>
      %c0_63 = arith.constant 0 : index
      %c0_64 = arith.constant 0 : index
      %135 = vector.load %arg8[%c0_63, %c0_64] : memref<16x128xf32, #tpu.memory_space<vmem>>, vector<16x128xf32>
      tpu.vector_store %arg8[%c0_63, %c0_64], %134 {strides = array<i32>} : memref<16x128xf32, #tpu.memory_space<vmem>>, vector<16x128xf32>,
      %c112_i32_65 = arith.constant 112 : i32
      %136 = vector.broadcast %c112_i32_65 : i32 to vector<1x128xi32>
      %137 = arith.cmpi slt, %14, %136 : vector<1x128xi32>
      %c112_i32_66 = arith.constant 112 : i32
      %138 = tpu.dynamic_rotate %119 by %c112_i32_66 dim 1 : vector<1x128xf32>, i32 -> vector<1x128xf32>
      %cst_67 = arith.constant 0.000000e+00 : f32
      %139 = vector.broadcast %cst_67 : f32 to vector<1x128xf32>
      %140 = arith.select %137, %138, %139 : vector<1x128xi1>, vector<1x128xf32>
      %141 = arith.maximumf %119, %140 : vector<1x128xf32>
      %c0_68 = arith.constant 0 : index
      %c0_69 = arith.constant 0 : index
      %142 = vector.load %arg9[%c0_68, %c0_69] : memref<1x128xf32, #tpu.memory_space<vmem>>, vector<1x128xf32>
      tpu.vector_store %arg9[%c0_68, %c0_69], %141 {strides = array<i32>} : memref<1x128xf32, #tpu.memory_space<vmem>>, vector<1x128xf32>,
    } else {
    }
    %c5_i32 = arith.constant 5 : i32
    %42 = arith.cmpi sgt, %13, %c5_i32 : i32
    %43 = arith.extui %42 : i1 to i32
    %c0_i32_24 = arith.constant 0 : i32
    %44 = arith.cmpi ne, %43, %c0_i32_24 : i32
    scf.if %44 {
      %c0_49 = arith.constant 0 : index
      %c0_50 = arith.constant 0 : index
      %119 = vector.load %arg9[%c0_49, %c0_50] : memref<1x128xf32, #tpu.memory_space<vmem>>, vector<1x128xf32>
      %cst_51 = arith.constant 5.000000e-01 : f32
      %120 = vector.broadcast %cst_51 : f32 to vector<1x128xf32>
      %121 = arith.cmpf ogt, %119, %120 : vector<1x128xf32>
      %c0_52 = arith.constant 0 : index
      %c0_53 = arith.constant 0 : index
      %122 = vector.load %arg7[%c0_52, %c0_53] : memref<8x128xf32, #tpu.memory_space<vmem>>, vector<8x128xf32>
      %c0_54 = arith.constant 0 : index
      %c0_55 = arith.constant 0 : index
      %123 = vector.load %arg7[%c0_54, %c0_55] : memref<8x128xf32, #tpu.memory_space<vmem>>, vector<8x128xf32>
      %c96_i32 = arith.constant 96 : i32
      %124 = tpu.dynamic_rotate %123 by %c96_i32 dim 1 : vector<8x128xf32>, i32 -> vector<8x128xf32>
      %125 = vector.shape_cast %121 : vector<1x128xi1> to vector<1x128xi1>
      %126 = vector.broadcast %125 : vector<1x128xi1> to vector<8x128xi1>
      %127 = arith.select %126, %122, %124 : vector<8x128xi1>, vector<8x128xf32>
      %c0_56 = arith.constant 0 : index
      %c0_57 = arith.constant 0 : index
      %128 = vector.load %arg7[%c0_56, %c0_57] : memref<8x128xf32, #tpu.memory_space<vmem>>, vector<8x128xf32>
      tpu.vector_store %arg7[%c0_56, %c0_57], %127 {strides = array<i32>} : memref<8x128xf32, #tpu.memory_space<vmem>>, vector<8x128xf32>,
      %c0_58 = arith.constant 0 : index
      %c0_59 = arith.constant 0 : index
      %129 = vector.load %arg8[%c0_58, %c0_59] : memref<16x128xf32, #tpu.memory_space<vmem>>, vector<16x128xf32>
      %c0_60 = arith.constant 0 : index
      %c0_61 = arith.constant 0 : index
      %130 = vector.load %arg8[%c0_60, %c0_61] : memref<16x128xf32, #tpu.memory_space<vmem>>, vector<16x128xf32>
      %c96_i32_62 = arith.constant 96 : i32
      %131 = tpu.dynamic_rotate %130 by %c96_i32_62 dim 1 : vector<16x128xf32>, i32 -> vector<16x128xf32>
      %132 = vector.shape_cast %121 : vector<1x128xi1> to vector<1x128xi1>
      %133 = vector.broadcast %132 : vector<1x128xi1> to vector<16x128xi1>
      %134 = arith.select %133, %129, %131 : vector<16x128xi1>, vector<16x128xf32>
      %c0_63 = arith.constant 0 : index
      %c0_64 = arith.constant 0 : index
      %135 = vector.load %arg8[%c0_63, %c0_64] : memref<16x128xf32, #tpu.memory_space<vmem>>, vector<16x128xf32>
      tpu.vector_store %arg8[%c0_63, %c0_64], %134 {strides = array<i32>} : memref<16x128xf32, #tpu.memory_space<vmem>>, vector<16x128xf32>,
      %c96_i32_65 = arith.constant 96 : i32
      %136 = vector.broadcast %c96_i32_65 : i32 to vector<1x128xi32>
      %137 = arith.cmpi slt, %14, %136 : vector<1x128xi32>
      %c96_i32_66 = arith.constant 96 : i32
      %138 = tpu.dynamic_rotate %119 by %c96_i32_66 dim 1 : vector<1x128xf32>, i32 -> vector<1x128xf32>
      %cst_67 = arith.constant 0.000000e+00 : f32
      %139 = vector.broadcast %cst_67 : f32 to vector<1x128xf32>
      %140 = arith.select %137, %138, %139 : vector<1x128xi1>, vector<1x128xf32>
      %141 = arith.maximumf %119, %140 : vector<1x128xf32>
      %c0_68 = arith.constant 0 : index
      %c0_69 = arith.constant 0 : index
      %142 = vector.load %arg9[%c0_68, %c0_69] : memref<1x128xf32, #tpu.memory_space<vmem>>, vector<1x128xf32>
      tpu.vector_store %arg9[%c0_68, %c0_69], %141 {strides = array<i32>} : memref<1x128xf32, #tpu.memory_space<vmem>>, vector<1x128xf32>,
    } else {
    }
    %c6_i32 = arith.constant 6 : i32
    %45 = arith.cmpi sgt, %13, %c6_i32 : i32
    %46 = arith.extui %45 : i1 to i32
    %c0_i32_25 = arith.constant 0 : i32
    %47 = arith.cmpi ne, %46, %c0_i32_25 : i32
    scf.if %47 {
      %c0_49 = arith.constant 0 : index
      %c0_50 = arith.constant 0 : index
      %119 = vector.load %arg9[%c0_49, %c0_50] : memref<1x128xf32, #tpu.memory_space<vmem>>, vector<1x128xf32>
      %cst_51 = arith.constant 5.000000e-01 : f32
      %120 = vector.broadcast %cst_51 : f32 to vector<1x128xf32>
      %121 = arith.cmpf ogt, %119, %120 : vector<1x128xf32>
      %c0_52 = arith.constant 0 : index
      %c0_53 = arith.constant 0 : index
      %122 = vector.load %arg7[%c0_52, %c0_53] : memref<8x128xf32, #tpu.memory_space<vmem>>, vector<8x128xf32>
      %c0_54 = arith.constant 0 : index
      %c0_55 = arith.constant 0 : index
      %123 = vector.load %arg7[%c0_54, %c0_55] : memref<8x128xf32, #tpu.memory_space<vmem>>, vector<8x128xf32>
      %c64_i32 = arith.constant 64 : i32
      %124 = tpu.dynamic_rotate %123 by %c64_i32 dim 1 : vector<8x128xf32>, i32 -> vector<8x128xf32>
      %125 = vector.shape_cast %121 : vector<1x128xi1> to vector<1x128xi1>
      %126 = vector.broadcast %125 : vector<1x128xi1> to vector<8x128xi1>
      %127 = arith.select %126, %122, %124 : vector<8x128xi1>, vector<8x128xf32>
      %c0_56 = arith.constant 0 : index
      %c0_57 = arith.constant 0 : index
      %128 = vector.load %arg7[%c0_56, %c0_57] : memref<8x128xf32, #tpu.memory_space<vmem>>, vector<8x128xf32>
      tpu.vector_store %arg7[%c0_56, %c0_57], %127 {strides = array<i32>} : memref<8x128xf32, #tpu.memory_space<vmem>>, vector<8x128xf32>,
      %c0_58 = arith.constant 0 : index
      %c0_59 = arith.constant 0 : index
      %129 = vector.load %arg8[%c0_58, %c0_59] : memref<16x128xf32, #tpu.memory_space<vmem>>, vector<16x128xf32>
      %c0_60 = arith.constant 0 : index
      %c0_61 = arith.constant 0 : index
      %130 = vector.load %arg8[%c0_60, %c0_61] : memref<16x128xf32, #tpu.memory_space<vmem>>, vector<16x128xf32>
      %c64_i32_62 = arith.constant 64 : i32
      %131 = tpu.dynamic_rotate %130 by %c64_i32_62 dim 1 : vector<16x128xf32>, i32 -> vector<16x128xf32>
      %132 = vector.shape_cast %121 : vector<1x128xi1> to vector<1x128xi1>
      %133 = vector.broadcast %132 : vector<1x128xi1> to vector<16x128xi1>
      %134 = arith.select %133, %129, %131 : vector<16x128xi1>, vector<16x128xf32>
      %c0_63 = arith.constant 0 : index
      %c0_64 = arith.constant 0 : index
      %135 = vector.load %arg8[%c0_63, %c0_64] : memref<16x128xf32, #tpu.memory_space<vmem>>, vector<16x128xf32>
      tpu.vector_store %arg8[%c0_63, %c0_64], %134 {strides = array<i32>} : memref<16x128xf32, #tpu.memory_space<vmem>>, vector<16x128xf32>,
      %c64_i32_65 = arith.constant 64 : i32
      %136 = vector.broadcast %c64_i32_65 : i32 to vector<1x128xi32>
      %137 = arith.cmpi slt, %14, %136 : vector<1x128xi32>
      %c64_i32_66 = arith.constant 64 : i32
      %138 = tpu.dynamic_rotate %119 by %c64_i32_66 dim 1 : vector<1x128xf32>, i32 -> vector<1x128xf32>
      %cst_67 = arith.constant 0.000000e+00 : f32
      %139 = vector.broadcast %cst_67 : f32 to vector<1x128xf32>
      %140 = arith.select %137, %138, %139 : vector<1x128xi1>, vector<1x128xf32>
      %141 = arith.maximumf %119, %140 : vector<1x128xf32>
      %c0_68 = arith.constant 0 : index
      %c0_69 = arith.constant 0 : index
      %142 = vector.load %arg9[%c0_68, %c0_69] : memref<1x128xf32, #tpu.memory_space<vmem>>, vector<1x128xf32>
      tpu.vector_store %arg9[%c0_68, %c0_69], %141 {strides = array<i32>} : memref<1x128xf32, #tpu.memory_space<vmem>>, vector<1x128xf32>,
    } else {
    }
    %c0_26 = arith.constant 0 : index
    %c0_27 = arith.constant 0 : index
    %48 = vector.load %arg7[%c0_26, %c0_27] : memref<8x128xf32, #tpu.memory_space<vmem>>, vector<8x128xf32>
    %c0_28 = arith.constant 0 : index
    %c0_29 = arith.constant 0 : index
    %49 = vector.load %arg8[%c0_28, %c0_29] : memref<16x128xf32, #tpu.memory_space<vmem>>, vector<16x128xf32>
    %50 = arith.subf %49, %3 : vector<16x128xf32>
    %51 = arith.mulf %50, %50 : vector<16x128xf32>
    %cst_30 = arith.constant dense<0.000000e+00> : vector<128xf32>
    %52 = vector.multi_reduction <add>, %51, %cst_30 [0] : vector<16x128xf32> to vector<128xf32>
    %53 = vector.shape_cast %52 : vector<128xf32> to vector<1x128xf32>
    %54 = math.sqrt %53 : vector<1x128xf32>
    %cst_31 = arith.constant 0.000000e+00 : f32
    %55 = vector.broadcast %cst_31 : f32 to vector<1x128xf32>
    %56 = arith.subf %55, %54 : vector<1x128xf32>
    %cst_32 = arith.constant 2.000000e+00 : f32
    %57 = vector.broadcast %cst_32 : f32 to vector<1x128xf32>
    %58 = arith.divf %56, %57 : vector<1x128xf32>
    %59 = math.exp %58 : vector<1x128xf32>
    %60 = vector.broadcast %11 : i32 to vector<1x128xi32>
    %61 = arith.cmpi ne, %14, %60 : vector<1x128xi32>
    %62 = arith.andi %16, %61 : vector<1x128xi1>
    %cst_33 = arith.constant -1.000000e+30 : f32
    %63 = vector.shape_cast %62 : vector<1x128xi1> to vector<1x128xi1>
    %64 = vector.broadcast %63 : vector<1x128xi1> to vector<8x128xi1>
    %65 = vector.broadcast %cst_33 : f32 to vector<8x128xf32>
    %66 = arith.select %64, %1, %65 : vector<8x128xi1>, vector<8x128xf32>
    %67 = vector.broadcast %9 : i32 to vector<1x128xi32>
    %68 = arith.cmpi ne, %14, %67 : vector<1x128xi32>
    %69 = arith.andi %16, %68 : vector<1x128xi1>
    %cst_34 = arith.constant -1.000000e+30 : f32
    %70 = vector.shape_cast %69 : vector<1x128xi1> to vector<1x128xi1>
    %71 = vector.broadcast %70 : vector<1x128xi1> to vector<8x128xi1>
    %72 = vector.broadcast %cst_34 : f32 to vector<8x128xf32>
    %73 = arith.select %71, %1, %72 : vector<8x128xi1>, vector<8x128xf32>
    %cst_35 = arith.constant dense<0xFF800000> : vector<8xf32>
    %74 = vector.multi_reduction <maximumf>, %66, %cst_35 [1] : vector<8x128xf32> to vector<8xf32>
    %75 = vector.shape_cast %74 : vector<8xf32> to vector<8x1xf32>
    %cst_36 = arith.constant dense<0xFF800000> : vector<8xf32>
    %76 = vector.multi_reduction <maximumf>, %73, %cst_36 [1] : vector<8x128xf32> to vector<8xf32>
    %77 = vector.shape_cast %76 : vector<8xf32> to vector<8x1xf32>
    %78 = vector.broadcast %75 : vector<8x1xf32> to vector<8x128xf32>
    %79 = arith.subf %66, %78 : vector<8x128xf32>
    %80 = math.exp %79 : vector<8x128xf32>
    %cst_37 = arith.constant dense<0.000000e+00> : vector<8xf32>
    %81 = vector.multi_reduction <add>, %80, %cst_37 [1] : vector<8x128xf32> to vector<8xf32>
    %82 = vector.shape_cast %81 : vector<8xf32> to vector<8x1xf32>
    %83 = math.log %82 : vector<8x1xf32>
    %84 = arith.addf %75, %83 : vector<8x1xf32>
    %85 = vector.broadcast %77 : vector<8x1xf32> to vector<8x128xf32>
    %86 = arith.subf %73, %85 : vector<8x128xf32>
    %87 = math.exp %86 : vector<8x128xf32>
    %cst_38 = arith.constant dense<0.000000e+00> : vector<8xf32>
    %88 = vector.multi_reduction <add>, %87, %cst_38 [1] : vector<8x128xf32> to vector<8xf32>
    %89 = vector.shape_cast %88 : vector<8xf32> to vector<8x1xf32>
    %90 = math.log %89 : vector<8x1xf32>
    %91 = arith.addf %77, %90 : vector<8x1xf32>
    %92 = arith.subf %91, %84 : vector<8x1xf32>
    %93 = arith.subf %48, %1 : vector<8x128xf32>
    %94 = vector.broadcast %92 : vector<8x1xf32> to vector<8x128xf32>
    %95 = arith.subf %93, %94 : vector<8x128xf32>
    %96 = arith.mulf %95, %95 : vector<8x128xf32>
    %cst_39 = arith.constant 1.600000e+01 : f32
    %97 = vector.broadcast %cst_39 : f32 to vector<8x128xf32>
    %98 = arith.minimumf %96, %97 : vector<8x128xf32>
    %99 = vector.broadcast %11 : i32 to vector<1x128xi32>
    %100 = arith.cmpi slt, %14, %99 : vector<1x128xi32>
    %101 = arith.andi %16, %100 : vector<1x128xi1>
    %102 = vector.broadcast %59 : vector<1x128xf32> to vector<8x128xf32>
    %103 = arith.mulf %102, %98 : vector<8x128xf32>
    %cst_40 = arith.constant 0.000000e+00 : f32
    %104 = vector.shape_cast %101 : vector<1x128xi1> to vector<1x128xi1>
    %105 = vector.broadcast %104 : vector<1x128xi1> to vector<8x128xi1>
    %106 = vector.broadcast %cst_40 : f32 to vector<8x128xf32>
    %107 = arith.select %105, %103, %106 : vector<8x128xi1>, vector<8x128xf32>
    %c1_i32_41 = arith.constant 1 : i32
    %108 = arith.subi %7, %c1_i32_41 : i32
    %c1_i32_42 = arith.constant 1 : i32
    %109 = arith.maxsi %108, %c1_i32_42 : i32
    %110 = arith.sitofp %109 : i32 to f32
    %111 = vector.shape_cast %107 : vector<8x128xf32> to vector<1x8x128xf32>
    %cst_43 = arith.constant dense<0.000000e+00> : vector<1xf32>
    %112 = vector.multi_reduction <add>, %111, %cst_43 [1, 2] : vector<1x8x128xf32> to vector<1xf32>
    %113 = vector.shape_cast %112 : vector<1xf32> to vector<1x1x1xf32>
    %114 = vector.extract %113[0, 0, 0] : f32 from vector<1x1x1xf32>
    %cst_44 = arith.constant 1.600000e+01 : f32
    %115 = arith.mulf %110, %cst_44 : f32
    %116 = arith.divf %114, %115 : f32
    %117 = vector.broadcast %116 : f32 to vector<1x1x1x128xf32>
    %c0_45 = arith.constant 0 : index
    %c0_46 = arith.constant 0 : index
    %c0_47 = arith.constant 0 : index
    %c0_48 = arith.constant 0 : index
    %118 = vector.load %arg6[%c0_45, %c0_46, %c0_47, %c0_48] : memref<1x1x1x128xf32, #tpu.memory_space<vmem>>, vector<1x1x1x128xf32>
    tpu.vector_store %arg6[%c0_45, %c0_46, %c0_47, %c0_48], %117 {strides = array<i32>} : memref<1x1x1x128xf32, #tpu.memory_space<vmem>>, vector<1x1x1x128xf32>,
    return
  }
  func.func @transform_0(%arg0: i32, %arg1: i32, %arg2: memref<2x4xi32, #tpu.memory_space<smem>>) -> (i32, i32, i32) {
    %c0_i32 = arith.constant 0 : i32
    %c0_i32_0 = arith.constant 0 : i32
    %c0_i32_1 = arith.constant 0 : i32
    return %arg0, %c0_i32, %c0_i32_0 : i32, i32, i32
  }
  func.func @transform_1(%arg0: i32, %arg1: i32, %arg2: memref<2x4xi32, #tpu.memory_space<smem>>) -> (i32, i32, i32) {
    %c0_i32 = arith.constant 0 : i32
    %c0_i32_0 = arith.constant 0 : i32
    return %arg0, %arg1, %c0_i32 : i32, i32, i32
  }
  func.func @transform_2(%arg0: i32, %arg1: i32, %arg2: memref<2x4xi32, #tpu.memory_space<smem>>) -> (i32, i32, i32) {
    %c0_i32 = arith.constant 0 : i32
    %c0_i32_0 = arith.constant 0 : i32
    %c0_i32_1 = arith.constant 0 : i32
    return %arg0, %c0_i32, %c0_i32_0 : i32, i32, i32
  }
  func.func @transform_3(%arg0: i32, %arg1: i32, %arg2: memref<2x4xi32, #tpu.memory_space<smem>>) -> (i32, i32, i32, i32) {
    %c0_i32 = arith.constant 0 : i32
    %c0_i32_0 = arith.constant 0 : i32
    %c0_i32_1 = arith.constant 0 : i32
    return %arg0, %arg1, %c0_i32, %c0_i32_0 : i32, i32, i32, i32
  }
}

</mosaic_0001>

<llo_original>
// kernel: tpu_custom_call.1
$region0: #{tpu_custom_call.1}
  #allocation0 [shape = 'u32[]', space=smem, size = 0x4, offset = 0x4, fixed_abs, tag = 'smem constant byte address 0x4 - core index']
  #allocation1 [shape = 'u32[144,128]{1,0:T(1,128)}', space=vmem, size = 0x12000, scoped, tag = 'internal scratch']
  #allocation2 [shape = 'f32[8,128]{1,0:T(8,128)}', space=vmem, size = 0x1000, scoped, tag = 'scratch operand']
  #allocation3 [shape = 'f32[16,128]{1,0:T(8,128)}', space=vmem, size = 0x2000, scoped, tag = 'scratch operand']
  #allocation4 [shape = 'f32[1,128]{1,0:T(1,128)}', space=vmem, size = 0x200, scoped, tag = 'scratch operand']
  #allocation5 [shape = 's32[1]{0}', space=sflag, size = 0x4, scoped, tag = 'scoped memory for tpu_custom_call.1']
  #allocation6 [shape = 'u8[1024]{0}', space=smem, size = 0x400, scoped, tag = 'prefetched SMEM operand 0']
  %s0 = inlined_call_operand.hbm [shape: s32[2,4], index: 0, kind: input, shape index: {}]
  %s1 = inlined_call_operand.vmem [shape: f32[2,1,128], index: 1, kind: input, shape index: {}]
  %s2 = inlined_call_operand.hbm [shape: f32[2,16,128], index: 2, kind: input, shape index: {}]
  %s3 = inlined_call_operand.hbm [shape: f32[2,16,128], index: 3, kind: input, shape index: {}]
  %s4 = inlined_call_operand.hbm [shape: f32[2,2,1,128], index: 4, kind: output, shape index: {}]
  %s5 = sld [smem:[#allocation0]]
  $region81: #{tpu_custom_call.1} parent=0
    _
  %s7 = ssub.s32 1, %s5
  %s8 = scalar_select 0, %s7, %s5
  %10 = dma.hbm_to_smem %s0, 32, [#allocation6], [#allocation5]
  %11 = dma.done [#allocation5], 32
  %12 = sfence
  $region1: #{tpu_custom_call.1} parent=0
    #allocation7 [shape = 'u8[8192]{0}', space=vmem, size = 0x2000, scoped, tag = 'input window, operand 2']
    #allocation8 [shape = 's32[2]{0}', space=sflag, size = 0x8, scoped, tag = 'scoped memory for tpu_custom_call.1']
    #allocation9 [shape = 's32[2]{0}', space=sflag, size = 0x8, scoped, tag = 'scoped memory for tpu_custom_call.1']
    #allocation10 [shape = 'u8[16384]{0}', space=vmem, size = 0x4000, scoped, tag = 'input window, operand 3']
    #allocation11 [shape = 's32[2]{0}', space=sflag, size = 0x8, scoped, tag = 'scoped memory for tpu_custom_call.1']
    #allocation12 [shape = 'u8[1024]{0}', space=vmem, size = 0x400, scoped, tag = 'output window, operand 0']
    %13 = vsyncpa [#allocation8], 0
    %s14 = scalar_lea.sflag [#allocation8], 1
    %15 = vsyncpa %s14, 0
    %16 = vsyncpa [#allocation11], 0
    %s17 = scalar_lea.sflag [#allocation11], 1
    %18 = vsyncpa %s17, 0
    %19 = vsyncpa [#allocation9], 0
    %s20 = scalar_lea.sflag [#allocation9], 1
    %21 = vsyncpa %s20, 0
    loop: start=0, step=1, limit=6
    $region2: #{tpu_custom_call.1} parent=1 // loop_pre_header
      _
    $region3: #{tpu_custom_call.1} parent=1 // loop_header
      %s23 = sphi 0, %s27
      %p24 = scmp.ge.s32.totalorder %s23, 6
      %s30 = sphi 0, %s42
      %s31 = sphi 0, %s38
      %s32 = sphi 0, %s30
      %s33 = sphi 0, %s31
      %s34 = sphi 0, %s32
      %s35 = sphi 0, %s33
      %s45 = sphi 0, %s47
      %s48 = sphi 0, %s45
      %s49 = sphi 0, %s48
      %s65 = sphi 0, %s49
      %s73 = sphi 0, %s75
      %s76 = sphi 0, %s73
      %s77 = sphi 0, %s76
      %s93 = sphi 0, %s77
      %s99 = sphi 0, %s101
      %s102 = sphi 0, %s99
      %s103 = sphi 0, %s102
      %s119 = sphi 0, %s103
      %s127 = sphi 0, %s129
      %s130 = sphi 0, %s127
      %s131 = sphi 0, %s130
      %s147 = sphi 0, %s131
    $region4: #{tpu_custom_call.1} parent=1 // loop_header_branch
      %26 = sbr.rel (%p24) target = $region8
    $region5: #{tpu_custom_call.1} parent=1 // loop_body
      %s28 = ssub.s32 %s23, 1
      %s29 = ssub.s32 %s23, 2
      %s36 = sadd.s32 1, %s31
      %p37 = scmp.ge.s32.totalorder %s36, 2
      %s38 = scalar_select %p37, 0, %s36
      %s39 = sadd.s32 1, %s30
      %s40 = scalar_select %p37, %s39, %s30
      %p41 = scmp.ge.s32.totalorder %s40, 2
      %s42 = scalar_select %p41, 0, %s40
      %s43 = ssub.s32 %s30, %s42
      %p44 = scmp.eq.s32.totalorder %s43, 0
      %s46 = sadd.s32 %s45, 1
      %s47 = scalar_select %p44, %s45, %s46
      %p50 = pneg %p44
      %p51 = scmp.eq.s32.totalorder %s23, 3
      %p52 = por %p50, %p51
      %p53 = scmp.ne.s32.totalorder %s45, %s48
      %p54 = scmp.eq.s32.totalorder %s23, 0
      %p55 = por %p53, %p54
      %p56 = scmp.ne.s32.totalorder %s45, %s48
      %p57 = scmp.eq.s32.totalorder %s28, 3
      %p58 = por %p56, %p57
      %p59 = scmp.ne.s32.totalorder %s48, %s49
      %p60 = scmp.eq.s32.totalorder %s28, 0
      %p61 = por %p59, %p60
      %p62 = scmp.ne.s32.totalorder %s48, %s49
      %p63 = scmp.eq.s32.totalorder %s29, 3
      %p64 = por %p62, %p63
      %p66 = scmp.ne.s32.totalorder %s49, %s65
      %p67 = scmp.eq.s32.totalorder %s29, 0
      %p68 = por %p66, %p67
      %s69 = ssub.s32 %s30, %s42
      %s70 = ssub.s32 %s31, %s38
      %s71 = sor.u32 %s69, %s70
      %p72 = scmp.eq.s32.totalorder %s71, 0
      %s74 = sadd.s32 %s73, 1
      %s75 = scalar_select %p72, %s73, %s74
      %p78 = pneg %p72
      %p79 = scmp.eq.s32.totalorder %s23, 3
      %p80 = por %p78, %p79
      %p81 = scmp.ne.s32.totalorder %s73, %s76
      %p82 = scmp.eq.s32.totalorder %s23, 0
      %p83 = por %p81, %p82
      %p84 = scmp.ne.s32.totalorder %s73, %s76
      %p85 = scmp.eq.s32.totalorder %s28, 3
      %p86 = por %p84, %p85
      %p87 = scmp.ne.s32.totalorder %s76, %s77
      %p88 = scmp.eq.s32.totalorder %s28, 0
      %p89 = por %p87, %p88
      %p90 = scmp.ne.s32.totalorder %s76, %s77
      %p91 = scmp.eq.s32.totalorder %s29, 3
      %p92 = por %p90, %p91
      %p94 = scmp.ne.s32.totalorder %s77, %s93
      %p95 = scmp.eq.s32.totalorder %s29, 0
      %p96 = por %p94, %p95
      %s97 = ssub.s32 %s30, %s42
      %p98 = scmp.eq.s32.totalorder %s97, 0
      %s100 = sadd.s32 %s99, 1
      %s101 = scalar_select %p98, %s99, %s100
      %p104 = pneg %p98
      %p105 = scmp.eq.s32.totalorder %s23, 3
      %p106 = por %p104, %p105
      %p107 = scmp.ne.s32.totalorder %s99, %s102
      %p108 = scmp.eq.s32.totalorder %s23, 0
      %p109 = por %p107, %p108
      %p110 = scmp.ne.s32.totalorder %s99, %s102
      %p111 = scmp.eq.s32.totalorder %s28, 3
      %p112 = por %p110, %p111
      %p113 = scmp.ne.s32.totalorder %s102, %s103
      %p114 = scmp.eq.s32.totalorder %s28, 0
      %p115 = por %p113, %p114
      %p116 = scmp.ne.s32.totalorder %s102, %s103
      %p117 = scmp.eq.s32.totalorder %s29, 3
      %p118 = por %p116, %p117
      %p120 = scmp.ne.s32.totalorder %s103, %s119
      %p121 = scmp.eq.s32.totalorder %s29, 0
      %p122 = por %p120, %p121
      %s123 = ssub.s32 %s30, %s42
      %s124 = ssub.s32 %s31, %s38
      %s125 = sor.u32 %s123, %s124
      %p126 = scmp.eq.s32.totalorder %s125, 0
      %s128 = sadd.s32 %s127, 1
      %s129 = scalar_select %p126, %s127, %s128
      %p132 = pneg %p126
      %p133 = scmp.eq.s32.totalorder %s23, 3
      %p134 = por %p132, %p133
      %p135 = scmp.ne.s32.totalorder %s127, %s130
      %p136 = scmp.eq.s32.totalorder %s23, 0
      %p137 = por %p135, %p136
      %p138 = scmp.ne.s32.totalorder %s127, %s130
      %p139 = scmp.eq.s32.totalorder %s28, 3
      %p140 = por %p138, %p139
      %p141 = scmp.ne.s32.totalorder %s130, %s131
      %p142 = scmp.eq.s32.totalorder %s28, 0
      %p143 = por %p141, %p142
      %p144 = scmp.ne.s32.totalorder %s130, %s131
      %p145 = scmp.eq.s32.totalorder %s29, 3
      %p146 = por %p144, %p145
      %p148 = scmp.ne.s32.totalorder %s131, %s147
      %p149 = scmp.eq.s32.totalorder %s29, 0
      %p150 = por %p148, %p149
      %p151 = scmp.le.s32.totalorder 1, %s23
      %p152 = scmp.lt.s32.totalorder %s23, 5
      %p153 = pnand %p151, %p152
      %p154 = pneg %p153
      // Predicated region
      $region9: #{tpu_custom_call.1} parent=5 // pred_check
        _
      $region10: #{tpu_custom_call.1} parent=5 // pred_check_branch
        %156 = sbr.rel (%p153) target = $region12
      $region11: #{tpu_custom_call.1} parent=5 // pred_region
        %s157 = ssub.s32 %s23, 1
      $region12: #{tpu_custom_call.1} parent=5 // pred_fallthru
        _
      %p158 = scmp.lt.s32.totalorder %s23, 4
      // Predicated region
      $region13: #{tpu_custom_call.1} parent=5 // pred_check
        %p159 = pneg %p158
      $region14: #{tpu_custom_call.1} parent=5 // pred_check_branch
        %161 = sbr.rel (%p159) target = $region16
      $region15: #{tpu_custom_call.1} parent=5 // pred_region
        // Predicated region
        $region17: #{tpu_custom_call.1} parent=15 // pred_check
          %p162 = pneg %p55
        $region18: #{tpu_custom_call.1} parent=15 // pred_check_branch
          %164 = sbr.rel (%p162) target = $region20
        $region19: #{tpu_custom_call.1} parent=15 // pred_region
          %p165 = scmp.lt.s32.totalorder %s30, 1
          %s166 = scalar_select %p165, %s30, 1
          %s167 = scalar_lea.vmem %s1, %s166
        $region20: #{tpu_custom_call.1} parent=15 // pred_fallthru
          _
        // Predicated region
        $region21: #{tpu_custom_call.1} parent=15 // pred_check
          %p168 = pneg %p83
        $region22: #{tpu_custom_call.1} parent=15 // pred_check_branch
          %170 = sbr.rel (%p168) target = $region24
        $region23: #{tpu_custom_call.1} parent=15 // pred_region
          %s171 = sand.u32 %s73, 1
          %s172 = scalar_lea.sflag [#allocation8], %s171
          %s173 = sand.u32 %s73, 1
          %s174 = smul.addr %s173, 8
          %s175 = scalar_lea.vmem [#allocation7], %s174
          %s177 = ssub.s32 128, 128
          %178 = vsyncadd %s172, %s177
          %s179 = smul.addr %s30, 2
          %s180 = sadd.s32 %s31, %s179
          %s181 = smul.addr %s180, 128
          %s182 = scalar_lea.hbm %s2, %s181
          %s184 = sshll.u32 %s175, 4
          %s185 = int_to_ptr.vmem [resolvable:$true] %s184
          %187 = dma.hbm_to_vmem [thread:$0]  %s182, 128, %s185, %s172
        $region24: #{tpu_custom_call.1} parent=15 // pred_fallthru
          _
        // Predicated region
        $region25: #{tpu_custom_call.1} parent=15 // pred_check
          %p188 = pneg %p109
        $region26: #{tpu_custom_call.1} parent=15 // pred_check_branch
          %190 = sbr.rel (%p188) target = $region28
        $region27: #{tpu_custom_call.1} parent=15 // pred_region
          %s191 = sand.u32 %s99, 1
          %s192 = scalar_lea.sflag [#allocation11], %s191
          %s193 = sand.u32 %s99, 1
          %s194 = smul.addr %s193, 16
          %s195 = scalar_lea.vmem [#allocation10], %s194
          %s197 = ssub.s32 256, 256
          %198 = vsyncadd %s192, %s197
          %s199 = smul.addr %s30, 2
          %s200 = smul.addr %s199, 128
          %s201 = scalar_lea.hbm %s3, %s200
          %s202 = sshll.u32 %s195, 4
          %s203 = int_to_ptr.vmem [resolvable:$true] %s202
          %208 = dma.hbm_to_vmem [thread:$0]  %s201, 256, %s203, %s192, 128, 128, 8
        $region28: #{tpu_custom_call.1} parent=15 // pred_fallthru
          _
      $region16: #{tpu_custom_call.1} parent=5 // pred_fallthru
        _
      %p209 = scmp.le.s32.totalorder 1, %s23
      %p210 = scmp.lt.s32.totalorder %s23, 5
      %p211 = pnand %p209, %p210
      %p212 = pneg %p211
      // Predicated region
      $region29: #{tpu_custom_call.1} parent=5 // pred_check
        _
      $region30: #{tpu_custom_call.1} parent=5 // pred_check_branch
        %214 = sbr.rel (%p211) target = $region32
      $region31: #{tpu_custom_call.1} parent=5 // pred_region
        %s215 = ssub.s32 %s23, 1
        %s216 = sand.u32 %s76, 1
        %s217 = scalar_lea.sflag [#allocation8], %s216
        %s218 = sand.u32 %s76, 1
        %s219 = smul.addr %s218, 8
        %s220 = scalar_lea.vmem [#allocation7], %s219
        // Predicated region
        $region33: #{tpu_custom_call.1} parent=31 // pred_check
          %p221 = pneg %p89
        $region34: #{tpu_custom_call.1} parent=31 // pred_check_branch
          %223 = sbr.rel (%p221) target = $region36
        $region35: #{tpu_custom_call.1} parent=31 // pred_region
          %224 = dma.done %s217, 128
        $region36: #{tpu_custom_call.1} parent=31 // pred_fallthru
          _
        %s225 = sand.u32 %s102, 1
        %s226 = scalar_lea.sflag [#allocation11], %s225
        %s227 = sand.u32 %s102, 1
        %s228 = smul.addr %s227, 16
        %s229 = scalar_lea.vmem [#allocation10], %s228
        // Predicated region
        $region37: #{tpu_custom_call.1} parent=31 // pred_check
          %p230 = pneg %p115
        $region38: #{tpu_custom_call.1} parent=31 // pred_check_branch
          %232 = sbr.rel (%p230) target = $region40
        $region39: #{tpu_custom_call.1} parent=31 // pred_region
          %233 = dma.done %s226, 256
        $region40: #{tpu_custom_call.1} parent=31 // pred_fallthru
          _
        %p234 = scmp.lt.s32.totalorder %s32, 1
        %s235 = scalar_select %p234, %s32, 1
        %s236 = scalar_lea.vmem %s1, %s235
        %p237 = pneg %p61
        %p238 = pneg %p58
        %s239 = sand.u32 %s76, 1
        %s240 = scalar_lea.sflag [#allocation8], %s239
        %s241 = sand.u32 %s76, 1
        %s242 = smul.addr %s241, 8
        %s243 = scalar_lea.vmem [#allocation7], %s242
        %p244 = pneg %p89
        %p245 = pneg %p86
        %s246 = sand.u32 %s102, 1
        %s247 = scalar_lea.sflag [#allocation11], %s246
        %s248 = sand.u32 %s102, 1
        %s249 = smul.addr %s248, 16
        %s250 = scalar_lea.vmem [#allocation10], %s249
        %p251 = pneg %p115
        %p252 = pneg %p112
        %p253 = pneg %p143
        %p254 = pneg %p140
        %s255 = sand.u32 %s130, 1
        %s256 = scalar_lea.sflag [#allocation9], %s255
        %s257 = sand.u32 %s130, 1
        %s258 = scalar_lea.vmem [#allocation12], %s257
        %p259 = scmp.lt.s32.totalorder %s32, 1
        %s260 = scalar_select %p259, %s32, 1
        %s261 = scalar_lea.vmem %s1, %s260
        %v262 = vld [vmem:[%s220] sm:$0xff]
        %v263 = vld [vmem:[%s229] sm:$0xff]
        %v264 = vld [vmem:[%s229 + $0x8] sm:$0xff]
        %v265 = vld [vmem:[%s261] sm:$0x1]
        %s266 = smul.u32 %s32, 128
        %s267 = sld [smem:[#allocation6 + %s266]]
        %s268 = sadd.s32 %s266, 1
        %s269 = sld [smem:[#allocation6 + %s268]]
        %s270 = sadd.s32 %s266, 2
        %s271 = sld [smem:[#allocation6 + %s270]]
        %s272 = sadd.s32 %s266, 3
        %s273 = sld [smem:[#allocation6 + %s272]]
        %v274 = vlaneseq
        %v275 = vand.u32 %v274, 127
        %vm276 = vcmp.gt.f32.partialorder %v265, 0.5
        %277 = vrot.lane.b32.xlu0 %v262, 127
        %v278 = vpop.permute.xlu0 %277
        %279 = vst [vmem:[#allocation2] sm:$0xff] %v278
        %280 = vrot.lane.b32.xlu0 %v263, 127
        %v281 = vpop.permute.xlu0 %280
        %282 = vrot.lane.b32.xlu0 %v264, 127
        %v283 = vpop.permute.xlu0 %282
        %284 = vst [vmem:[#allocation3] sm:$0xff] %v281
        %285 = vst [vmem:[#allocation3 + $0x8] sm:$0xff] %v283
        %vm286 = vcmp.lt.s32.totalorder %v275, 127
        %287 = vrot.lane.b32.xlu0 %v265, 127
        %v288 = vpop.permute.xlu0 %287
        %v289 = vsel %vm286, %v288, 0.0
        %290 = vst [vmem:[#allocation4] sm:$0x1] %v289
        %p291 = scmp.gt.s32.totalorder %s273, 0
        // Predicated region
        $region41: #{tpu_custom_call.1} parent=31 // pred_check
          %p292 = pneg %p291
        $region42: #{tpu_custom_call.1} parent=31 // pred_check_branch
          %294 = sbr.rel (%p292) target = $region44
        $region43: #{tpu_custom_call.1} parent=31 // pred_region
          %v295 = vld [vmem:[#allocation4] sm:$0x1]
          %vm296 = vcmp.gt.f32.partialorder %v295, 0.5
          %v297 = vld [vmem:[#allocation2] sm:$0xff]
          %298 = vrot.lane.b32.xlu0 %v297, 127
          %v299 = vpop.permute.xlu0 %298
          %v300 = vsel %vm296, 1, 0
          %v301 = vlaneseq
          %v302 = vshrl.u32 %v301, 7
          %v303 = vsub.s32 0, %v302
          %v304 = vrot.slane %v300, %v303
          %vm305 = vcmp.eq.s32.totalorder %v304, 1
          %v306 = vsel %vm305, %v297, %v299
          %307 = vst [vmem:[#allocation2] sm:$0xff] %v306
          %v308 = vld [vmem:[#allocation3] sm:$0xff]
          %v309 = vld [vmem:[#allocation3 + $0x8] sm:$0xff]
          %310 = vrot.lane.b32.xlu0 %v308, 127
          %v311 = vpop.permute.xlu0 %310
          %312 = vrot.lane.b32.xlu0 %v309, 127
          %v313 = vpop.permute.xlu0 %312
          %v314 = vsel %vm305, %v308, %v311
          %v315 = vsel %vm305, %v309, %v313
          %316 = vst [vmem:[#allocation3] sm:$0xff] %v314
          %317 = vst [vmem:[#allocation3 + $0x8] sm:$0xff] %v315
          %318 = vrot.lane.b32.xlu0 %v295, 127
          %v319 = vpop.permute.xlu0 %318
          %v320 = vsel %vm286, %v319, 0.0
          %v321 = vmax.f32 %v295, %v320
          %322 = vst [vmem:[#allocation4] sm:$0x1] %v321
        $region44: #{tpu_custom_call.1} parent=31 // pred_fallthru
          _
        %p323 = scmp.gt.s32.totalorder %s273, 1
        // Predicated region
        $region45: #{tpu_custom_call.1} parent=31 // pred_check
          %p324 = pneg %p323
        $region46: #{tpu_custom_call.1} parent=31 // pred_check_branch
          %326 = sbr.rel (%p324) target = $region48
        $region47: #{tpu_custom_call.1} parent=31 // pred_region
          %v327 = vld [vmem:[#allocation4] sm:$0x1]
          %vm328 = vcmp.gt.f32.partialorder %v327, 0.5
          %v329 = vld [vmem:[#allocation2] sm:$0xff]
          %330 = vrot.lane.b32.xlu0 %v329, 126
          %v331 = vpop.permute.xlu0 %330
          %v332 = vsel %vm328, 1, 0
          %v333 = vlaneseq
          %v334 = vshrl.u32 %v333, 7
          %v335 = vsub.s32 0, %v334
          %v336 = vrot.slane %v332, %v335
          %vm337 = vcmp.eq.s32.totalorder %v336, 1
          %v338 = vsel %vm337, %v329, %v331
          %339 = vst [vmem:[#allocation2] sm:$0xff] %v338
          %v340 = vld [vmem:[#allocation3] sm:$0xff]
          %v341 = vld [vmem:[#allocation3 + $0x8] sm:$0xff]
          %342 = vrot.lane.b32.xlu0 %v340, 126
          %v343 = vpop.permute.xlu0 %342
          %344 = vrot.lane.b32.xlu0 %v341, 126
          %v345 = vpop.permute.xlu0 %344
          %v346 = vsel %vm337, %v340, %v343
          %v347 = vsel %vm337, %v341, %v345
          %348 = vst [vmem:[#allocation3] sm:$0xff] %v346
          %349 = vst [vmem:[#allocation3 + $0x8] sm:$0xff] %v347
          %vm350 = vcmp.lt.s32.totalorder %v275, 126
          %351 = vrot.lane.b32.xlu0 %v327, 126
          %v352 = vpop.permute.xlu0 %351
          %v353 = vsel %vm350, %v352, 0.0
          %v354 = vmax.f32 %v327, %v353
          %355 = vst [vmem:[#allocation4] sm:$0x1] %v354
        $region48: #{tpu_custom_call.1} parent=31 // pred_fallthru
          _
        %p356 = scmp.gt.s32.totalorder %s273, 2
        // Predicated region
        $region49: #{tpu_custom_call.1} parent=31 // pred_check
          %p357 = pneg %p356
        $region50: #{tpu_custom_call.1} parent=31 // pred_check_branch
          %359 = sbr.rel (%p357) target = $region52
        $region51: #{tpu_custom_call.1} parent=31 // pred_region
          %v360 = vld [vmem:[#allocation4] sm:$0x1]
          %vm361 = vcmp.gt.f32.partialorder %v360, 0.5
          %v362 = vld [vmem:[#allocation2] sm:$0xff]
          %363 = vrot.lane.b32.xlu0 %v362, 124
          %v364 = vpop.permute.xlu0 %363
          %v365 = vsel %vm361, 1, 0
          %v366 = vlaneseq
          %v367 = vshrl.u32 %v366, 7
          %v368 = vsub.s32 0, %v367
          %v369 = vrot.slane %v365, %v368
          %vm370 = vcmp.eq.s32.totalorder %v369, 1
          %v371 = vsel %vm370, %v362, %v364
          %372 = vst [vmem:[#allocation2] sm:$0xff] %v371
          %v373 = vld [vmem:[#allocation3] sm:$0xff]
          %v374 = vld [vmem:[#allocation3 + $0x8] sm:$0xff]
          %375 = vrot.lane.b32.xlu0 %v373, 124
          %v376 = vpop.permute.xlu0 %375
          %377 = vrot.lane.b32.xlu0 %v374, 124
          %v378 = vpop.permute.xlu0 %377
          %v379 = vsel %vm370, %v373, %v376
          %v380 = vsel %vm370, %v374, %v378
          %381 = vst [vmem:[#allocation3] sm:$0xff] %v379
          %382 = vst [vmem:[#allocation3 + $0x8] sm:$0xff] %v380
          %vm383 = vcmp.lt.s32.totalorder %v275, 124
          %384 = vrot.lane.b32.xlu0 %v360, 124
          %v385 = vpop.permute.xlu0 %384
          %v386 = vsel %vm383, %v385, 0.0
          %v387 = vmax.f32 %v360, %v386
          %388 = vst [vmem:[#allocation4] sm:$0x1] %v387
        $region52: #{tpu_custom_call.1} parent=31 // pred_fallthru
          _
        %p389 = scmp.gt.s32.totalorder %s273, 3
        // Predicated region
        $region53: #{tpu_custom_call.1} parent=31 // pred_check
          %p390 = pneg %p389
        $region54: #{tpu_custom_call.1} parent=31 // pred_check_branch
          %392 = sbr.rel (%p390) target = $region56
        $region55: #{tpu_custom_call.1} parent=31 // pred_region
          %v393 = vld [vmem:[#allocation4] sm:$0x1]
          %vm394 = vcmp.gt.f32.partialorder %v393, 0.5
          %v395 = vld [vmem:[#allocation2] sm:$0xff]
          %396 = vrot.lane.b32.xlu0 %v395, 120
          %v397 = vpop.permute.xlu0 %396
          %v398 = vsel %vm394, 1, 0
          %v399 = vlaneseq
          %v400 = vshrl.u32 %v399, 7
          %v401 = vsub.s32 0, %v400
          %v402 = vrot.slane %v398, %v401
          %vm403 = vcmp.eq.s32.totalorder %v402, 1
          %v404 = vsel %vm403, %v395, %v397
          %405 = vst [vmem:[#allocation2] sm:$0xff] %v404
          %v406 = vld [vmem:[#allocation3] sm:$0xff]
          %v407 = vld [vmem:[#allocation3 + $0x8] sm:$0xff]
          %408 = vrot.lane.b32.xlu0 %v406, 120
          %v409 = vpop.permute.xlu0 %408
          %410 = vrot.lane.b32.xlu0 %v407, 120
          %v411 = vpop.permute.xlu0 %410
          %v412 = vsel %vm403, %v406, %v409
          %v413 = vsel %vm403, %v407, %v411
          %414 = vst [vmem:[#allocation3] sm:$0xff] %v412
          %415 = vst [vmem:[#allocation3 + $0x8] sm:$0xff] %v413
          %vm416 = vcmp.lt.s32.totalorder %v275, 120
          %417 = vrot.lane.b32.xlu0 %v393, 120
          %v418 = vpop.permute.xlu0 %417
          %v419 = vsel %vm416, %v418, 0.0
          %v420 = vmax.f32 %v393, %v419
          %421 = vst [vmem:[#allocation4] sm:$0x1] %v420
        $region56: #{tpu_custom_call.1} parent=31 // pred_fallthru
          _
        %p422 = scmp.gt.s32.totalorder %s273, 4
        // Predicated region
        $region57: #{tpu_custom_call.1} parent=31 // pred_check
          %p423 = pneg %p422
        $region58: #{tpu_custom_call.1} parent=31 // pred_check_branch
          %425 = sbr.rel (%p423) target = $region60
        $region59: #{tpu_custom_call.1} parent=31 // pred_region
          %v426 = vld [vmem:[#allocation4] sm:$0x1]
          %vm427 = vcmp.gt.f32.partialorder %v426, 0.5
          %v428 = vld [vmem:[#allocation2] sm:$0xff]
          %429 = vrot.lane.b32.xlu0 %v428, 112
          %v430 = vpop.permute.xlu0 %429
          %v431 = vsel %vm427, 1, 0
          %v432 = vlaneseq
          %v433 = vshrl.u32 %v432, 7
          %v434 = vsub.s32 0, %v433
          %v435 = vrot.slane %v431, %v434
          %vm436 = vcmp.eq.s32.totalorder %v435, 1
          %v437 = vsel %vm436, %v428, %v430
          %438 = vst [vmem:[#allocation2] sm:$0xff] %v437
          %v439 = vld [vmem:[#allocation3] sm:$0xff]
          %v440 = vld [vmem:[#allocation3 + $0x8] sm:$0xff]
          %441 = vrot.lane.b32.xlu0 %v439, 112
          %v442 = vpop.permute.xlu0 %441
          %443 = vrot.lane.b32.xlu0 %v440, 112
          %v444 = vpop.permute.xlu0 %443
          %v445 = vsel %vm436, %v439, %v442
          %v446 = vsel %vm436, %v440, %v444
          %447 = vst [vmem:[#allocation3] sm:$0xff] %v445
          %448 = vst [vmem:[#allocation3 + $0x8] sm:$0xff] %v446
          %vm449 = vcmp.lt.s32.totalorder %v275, 112
          %450 = vrot.lane.b32.xlu0 %v426, 112
          %v451 = vpop.permute.xlu0 %450
          %v452 = vsel %vm449, %v451, 0.0
          %v453 = vmax.f32 %v426, %v452
          %454 = vst [vmem:[#allocation4] sm:$0x1] %v453
        $region60: #{tpu_custom_call.1} parent=31 // pred_fallthru
          _
        %p455 = scmp.gt.s32.totalorder %s273, 5
        // Predicated region
        $region61: #{tpu_custom_call.1} parent=31 // pred_check
          %p456 = pneg %p455
        $region62: #{tpu_custom_call.1} parent=31 // pred_check_branch
          %458 = sbr.rel (%p456) target = $region64
        $region63: #{tpu_custom_call.1} parent=31 // pred_region
          %v459 = vld [vmem:[#allocation4] sm:$0x1]
          %vm460 = vcmp.gt.f32.partialorder %v459, 0.5
          %v461 = vld [vmem:[#allocation2] sm:$0xff]
          %462 = vrot.lane.b32.xlu0 %v461, 96
          %v463 = vpop.permute.xlu0 %462
          %v464 = vsel %vm460, 1, 0
          %v465 = vlaneseq
          %v466 = vshrl.u32 %v465, 7
          %v467 = vsub.s32 0, %v466
          %v468 = vrot.slane %v464, %v467
          %vm469 = vcmp.eq.s32.totalorder %v468, 1
          %v470 = vsel %vm469, %v461, %v463
          %471 = vst [vmem:[#allocation2] sm:$0xff] %v470
          %v472 = vld [vmem:[#allocation3] sm:$0xff]
          %v473 = vld [vmem:[#allocation3 + $0x8] sm:$0xff]
          %474 = vrot.lane.b32.xlu0 %v472, 96
          %v475 = vpop.permute.xlu0 %474
          %476 = vrot.lane.b32.xlu0 %v473, 96
          %v477 = vpop.permute.xlu0 %476
          %v478 = vsel %vm469, %v472, %v475
          %v479 = vsel %vm469, %v473, %v477
          %480 = vst [vmem:[#allocation3] sm:$0xff] %v478
          %481 = vst [vmem:[#allocation3 + $0x8] sm:$0xff] %v479
          %vm482 = vcmp.lt.s32.totalorder %v275, 96
          %483 = vrot.lane.b32.xlu0 %v459, 96
          %v484 = vpop.permute.xlu0 %483
          %v485 = vsel %vm482, %v484, 0.0
          %v486 = vmax.f32 %v459, %v485
          %487 = vst [vmem:[#allocation4] sm:$0x1] %v486
        $region64: #{tpu_custom_call.1} parent=31 // pred_fallthru
          _
        %p488 = scmp.gt.s32.totalorder %s273, 6
        // Predicated region
        $region65: #{tpu_custom_call.1} parent=31 // pred_check
          %p489 = pneg %p488
        $region66: #{tpu_custom_call.1} parent=31 // pred_check_branch
          %491 = sbr.rel (%p489) target = $region68
        $region67: #{tpu_custom_call.1} parent=31 // pred_region
          %v492 = vld [vmem:[#allocation4] sm:$0x1]
          %vm493 = vcmp.gt.f32.partialorder %v492, 0.5
          %v494 = vld [vmem:[#allocation2] sm:$0xff]
          %495 = vrot.lane.b32.xlu0 %v494, 64
          %v496 = vpop.permute.xlu0 %495
          %v497 = vsel %vm493, 1, 0
          %v498 = vlaneseq
          %v499 = vshrl.u32 %v498, 7
          %v500 = vsub.s32 0, %v499
          %v501 = vrot.slane %v497, %v500
          %vm502 = vcmp.eq.s32.totalorder %v501, 1
          %v503 = vsel %vm502, %v494, %v496
          %504 = vst [vmem:[#allocation2] sm:$0xff] %v503
          %v505 = vld [vmem:[#allocation3] sm:$0xff]
          %v506 = vld [vmem:[#allocation3 + $0x8] sm:$0xff]
          %507 = vrot.lane.b32.xlu0 %v505, 64
          %v508 = vpop.permute.xlu0 %507
          %509 = vrot.lane.b32.xlu0 %v506, 64
          %v510 = vpop.permute.xlu0 %509
          %v511 = vsel %vm502, %v505, %v508
          %v512 = vsel %vm502, %v506, %v510
          %513 = vst [vmem:[#allocation3] sm:$0xff] %v511
          %514 = vst [vmem:[#allocation3 + $0x8] sm:$0xff] %v512
          %vm515 = vcmp.lt.s32.totalorder %v275, 64
          %516 = vrot.lane.b32.xlu0 %v492, 64
          %v517 = vpop.permute.xlu0 %516
          %v518 = vsel %vm515, %v517, 0.0
          %v519 = vmax.f32 %v492, %v518
          %520 = vst [vmem:[#allocation4] sm:$0x1] %v519
        $region68: #{tpu_custom_call.1} parent=31 // pred_fallthru
          _
        %v521 = vld [vmem:[#allocation2] sm:$0xff]
        %v522 = vld [vmem:[#allocation3] sm:$0xff]
        %v523 = vld [vmem:[#allocation3 + $0x8] sm:$0xff]
        %v524 = vsub.f32 %v522, %v263
        %v525 = vsub.f32 %v523, %v264
        %v526 = vmul.f32 %v524, %v524
        %v527 = vmul.f32 %v525, %v525
        %v528 = vadd.f32 %v526, %v527
        %v529 = vrot.slane %v528, 4
        %v530 = vadd.f32 %v528, %v529
        %v531 = vrot.slane %v530, 2
        %v532 = vadd.f32 %v530, %v531
        %v533 = vrot.slane %v532, 1
        %v534 = vadd.f32 %v532, %v533
        %v535 = vrsqrt.pop %v534
        %v536 = vmul.f32 %v534, %v535
        %vm537 = vcmp.eq.f32.partialorder %v534, inf
        %v538 = vsel %vm537, %v534, %v536
        %vm539 = vcmp.eq.f32.partialorder %v534, 0.0
        %v540 = vand.u32 %v534, 2147483648
        %v541 = vsel %vm539, %v540, %v538
        %v542 = vsub.f32 0.0, %v541
        %v543 = vrcp.pop 2.0
        %v544 = vmul.f32 %v542, %v543
        %v545 = vmul.f32 %v544, 1.442695
        %v546 = vpow.pop %v545
        %v547 = vstv %s271
        %vm548 = vcmp.ne.s32.totalorder %v275, %v547
        %vm549 = vmand %vm276, %vm548
        %v550 = vsel %vm549, 1, 0
        %v551 = vlaneseq
        %v552 = vshrl.u32 %v551, 7
        %v553 = vsub.s32 0, %v552
        %v554 = vrot.slane %v550, %v553
        %vm555 = vcmp.eq.s32.totalorder %v554, 1
        %v556 = vsel %vm555, %v262, -1e+30
        %v557 = vstv %s269
        %vm558 = vcmp.ne.s32.totalorder %v275, %v557
        %vm559 = vmand %vm276, %vm558
        %v560 = vsel %vm559, 1, 0
        %v561 = vlaneseq
        %v562 = vshrl.u32 %v561, 7
        %v563 = vsub.s32 0, %v562
        %v564 = vrot.slane %v560, %v563
        %vm565 = vcmp.eq.s32.totalorder %v564, 1
        %v566 = vsel %vm565, %v262, -1e+30
        %567 = vmax.xlane.f32.xlu0 %v556
        %v568 = vpop.xlane.xlu0 %567
        %569 = vmax.xlane.f32.xlu0 %v566
        %v570 = vpop.xlane.xlu0 %569
        %v571 = vsub.f32 %v556, %v568
        %v572 = vmul.f32 %v571, 1.442695
        %v573 = vpow.pop %v572
        %574 = vadd.xlane.f32.xlu0 %v573
        %v575 = vpop.xlane.xlu0 %574
        %v576 = vlog2.pop %v575
        %v577 = vmul.f32 %v576, 0.6931472
        %v578 = vadd.f32 %v568, %v577
        %v579 = vsub.f32 %v566, %v570
        %v580 = vmul.f32 %v579, 1.442695
        %v581 = vpow.pop %v580
        %582 = vadd.xlane.f32.xlu0 %v581
        %v583 = vpop.xlane.xlu0 %582
        %v584 = vlog2.pop %v583
        %v585 = vmul.f32 %v584, 0.6931472
        %v586 = vadd.f32 %v570, %v585
        %v587 = vsub.f32 %v586, %v578
        %v588 = vsub.f32 %v521, %v262
        %v589 = vsub.f32 %v588, %v587
        %v590 = vmul.f32 %v589, %v589
        %v591 = vmin.f32 %v590, 16.0
        %vm592 = vcmp.lt.s32.totalorder %v275, %v547
        %vm593 = vmand %vm276, %vm592
        %v594 = vmul.f32 %v546, %v591
        %v595 = vsel %vm593, 1, 0
        %v596 = vlaneseq
        %v597 = vshrl.u32 %v596, 7
        %v598 = vsub.s32 0, %v597
        %v599 = vrot.slane %v595, %v598
        %vm600 = vcmp.eq.s32.totalorder %v599, 1
        %v601 = vsel %vm600, %v594, 0.0
        %s602 = ssub.s32 %s267, 1
        %p603 = scmp.gt.s32.totalorder %s602, 1
        %s604 = scalar_select %p603, %s602, 1
        %s605 = scvt.s32.f32 %s604
        %606 = vadd.xlane.f32.xlu0 %v601
        %v607 = vpop.xlane.xlu0 %606
        %v608 = vrot.slane %v607, 4
        %v609 = vadd.f32 %v607, %v608
        %v610 = vrot.slane %v609, 2
        %v611 = vadd.f32 %v609, %v610
        %v612 = vrot.slane %v611, 1
        %v613 = vadd.f32 %v611, %v612
        %s614 = vtos %v613
        %s615 = smul.f32 %s605, 16.0
        %v616 = vstv %s615
        %v617 = vrcp.pop %v616
        %s618 = vtos %v617
        %s619 = smul.f32 %s614, %s618
        %v620 = vstv %s619
        %621 = vst [vmem:[%s258] sm:$0x1] %v620
        %s622 = sand.u32 %s130, 1
        %s623 = scalar_lea.sflag [#allocation9], %s622
        %s624 = sand.u32 %s130, 1
        %s625 = scalar_lea.vmem [#allocation12], %s624
        // Predicated region
        $region69: #{tpu_custom_call.1} parent=31 // pred_check
          %p626 = pneg %p140
        $region70: #{tpu_custom_call.1} parent=31 // pred_check_branch
          %628 = sbr.rel (%p626) target = $region72
        $region71: #{tpu_custom_call.1} parent=31 // pred_region
          %s630 = ssub.s32 16, 16
          %631 = vsyncadd %s623, %s630
          %s632 = smul.addr %s32, 2
          %s633 = sadd.s32 %s33, %s632
          %s634 = smul.addr %s633, 16
          %s635 = scalar_lea.hbm %s4, %s634
          %s637 = sshll.u32 %s625, 4
          %s638 = int_to_ptr.vmem [resolvable:$true] %s637
          %640 = dma.vmem_to_hbm [thread:$0]  %s638, 16, %s635, %s623
        $region72: #{tpu_custom_call.1} parent=31 // pred_fallthru
          _
      $region32: #{tpu_custom_call.1} parent=5 // pred_fallthru
        _
      %p641 = scmp.le.s32.totalorder 2, %s23
      // Predicated region
      $region73: #{tpu_custom_call.1} parent=5 // pred_check
        %p642 = pneg %p641
      $region74: #{tpu_custom_call.1} parent=5 // pred_check_branch
        %644 = sbr.rel (%p642) target = $region76
      $region75: #{tpu_custom_call.1} parent=5 // pred_region
        %s645 = ssub.s32 %s23, 2
        // Predicated region
        $region77: #{tpu_custom_call.1} parent=75 // pred_check
          %p646 = pneg %p146
        $region78: #{tpu_custom_call.1} parent=75 // pred_check_branch
          %648 = sbr.rel (%p646) target = $region80
        $region79: #{tpu_custom_call.1} parent=75 // pred_region
          %s649 = sand.u32 %s131, 1
          %s650 = scalar_lea.sflag [#allocation9], %s649
          %s651 = sand.u32 %s131, 1
          %s652 = scalar_lea.vmem [#allocation12], %s651
          %653 = dma.done %s650, 16
        $region80: #{tpu_custom_call.1} parent=75 // pred_fallthru
          _
      $region76: #{tpu_custom_call.1} parent=5 // pred_fallthru
        _
    $region6: #{tpu_custom_call.1} parent=1 // loop_footer
      %s27 = sadd.s32 1, %s23
    $region7: #{tpu_custom_call.1} parent=1 // loop_footer_branch
      %22 = sbr.rel target = $region3
    $region8: #{tpu_custom_call.1} parent=1 // loop_exit
      _
    %654 = vsyncpa [#allocation8], 1
    %s655 = scalar_lea.sflag [#allocation8], 1
    %656 = vsyncpa %s655, 1
    %657 = vsyncpa [#allocation11], 1
    %s658 = scalar_lea.sflag [#allocation11], 1
    %659 = vsyncpa %s658, 1
    %660 = vsyncpa [#allocation9], 1
    %s661 = scalar_lea.sflag [#allocation9], 1
    %662 = vsyncpa %s661, 1

</llo_original>
